<compile_context>
chip_gen: v6e
topology: v6e:2x2x1
jax: 0.10.0
libtpu: 0.0.40
codegen_flags: <defaults>
</compile_context>

<pallas_src>
import math
import functools

import jax
import jax.numpy as jnp
from jax.experimental import pallas as pl
from jax.experimental.pallas import tpu as pltpu

D_MODEL = 50
HEADS = 2
D_K = D_MODEL // HEADS          # 25 (real head width; used for the softmax scale)

# Lane-aligned padded layout (host-side zero padding only — no math change).
D_PAD = 128                     # input feature lanes, 50 -> 128
DK_PAD = 128                    # per-head lanes, 25 -> 128 (head h starts at lane h*128)
HP = HEADS * DK_PAD             # 256: fused projected width
D_OUT_PAD = 128                 # output feature lanes, 50 -> 128 (lane-dense store)


def _mha_kernel(q_ref, k_ref, v_ref, wqkv_ref, bqkv_ref, wo_ref, bo_ref, o_ref,
                *, gb, seq, heads, dk_pad, scale):
    """One grid step: gb batch elements (gb*seq rows), full MHA forward."""
    dot_dt = wqkv_ref.dtype      # matmul operand dtype (f32 or bf16); accumulation is f32

    # Fused, pre-transposed input projections over ALL rows of this step at once.
    qp = jnp.dot(q_ref[...], wqkv_ref[0], preferred_element_type=jnp.float32) + bqkv_ref[0]
    kp = jnp.dot(k_ref[...], wqkv_ref[1], preferred_element_type=jnp.float32) + bqkv_ref[1]
    vp = jnp.dot(v_ref[...], wqkv_ref[2], preferred_element_type=jnp.float32) + bqkv_ref[2]
    # (gb*seq, heads*dk_pad); head h occupies lanes [h*dk_pad, (h+1)*dk_pad), pad lanes are 0.

    qkt_dims = (((1,), (1,)), ((), ()))   # contract last dims of both => q @ k.T, no XLU transpose

    for g in range(gb):                    # static unroll; row slices are sublane-aligned (seq = 8)
        r0, r1 = g * seq, (g + 1) * seq
        ctx_heads = []
        for h in range(heads):             # static unroll; lane slices are 128-aligned
            c0, c1 = h * dk_pad, (h + 1) * dk_pad
            qh = qp[r0:r1, c0:c1].astype(dot_dt)
            kh = kp[r0:r1, c0:c1].astype(dot_dt)
            vh = vp[r0:r1, c0:c1].astype(dot_dt)

            scores = jax.lax.dot_general(qh, kh, qkt_dims,
                                         preferred_element_type=jnp.float32) * scale
            scores = scores - jnp.max(scores, axis=-1, keepdims=True)
            p = jnp.exp(scores)
            inv_denom = pl.reciprocal(jnp.sum(p, axis=-1, keepdims=True), approx=True)
            p = p * inv_denom
            ctx_heads.append(jnp.dot(p.astype(dot_dt), vh,
                                     preferred_element_type=jnp.float32))

        # Concat at a 128-lane boundary (free), then one fused output projection.
        ctx = jnp.concatenate(ctx_heads, axis=-1).astype(dot_dt)      # (seq, heads*dk_pad)
        out_g = jnp.dot(ctx, wo_ref[...], preferred_element_type=jnp.float32) + bo_ref[...]
        o_ref[r0:r1, :] = out_g.astype(o_ref.dtype)                    # lane-dense (seq, 128) store


def _pack_qkv_weight(w, b):
    """PyTorch (out,in) Linear -> pre-transposed, head-lane-padded (D_PAD, HP) + (1, HP) bias."""
    wt = jnp.asarray(w, jnp.float32).T.reshape(D_MODEL, HEADS, D_K)          # (in, H, d_k)
    w_pad = jnp.zeros((D_PAD, HEADS, DK_PAD), jnp.float32).at[:D_MODEL, :, :D_K].set(wt)
    b_pad = jnp.zeros((HEADS, DK_PAD), jnp.float32).at[:, :D_K].set(
        jnp.asarray(b, jnp.float32).reshape(HEADS, D_K))
    return w_pad.reshape(D_PAD, HP), b_pad.reshape(1, HP)


def _pack_out_weight(w, b):
    """PyTorch (out,in) Wo -> pre-transposed (HP, D_OUT_PAD) with zero rows for pad lanes."""
    wt = jnp.asarray(w, jnp.float32).T.reshape(HEADS, D_K, D_MODEL)          # (H, d_k, out)
    w_pad = jnp.zeros((HEADS, DK_PAD, D_OUT_PAD), jnp.float32).at[:, :D_K, :D_MODEL].set(wt)
    b_pad = jnp.zeros((1, D_OUT_PAD), jnp.float32).at[0, :D_MODEL].set(
        jnp.asarray(b, jnp.float32))
    return w_pad.reshape(HP, D_OUT_PAD), b_pad


def multi_head_attention(q, k, v, params, *, matmul_dtype=jnp.float32):
    """q, k, v: (B, S, D_MODEL).  params: PyTorch-layout weights/biases."""
    B, S, D = q.shape
    assert D == D_MODEL

    # ---- host-side layout plumbing (transposes, head padding, fusion) ----
    wq, bq = _pack_qkv_weight(params["wq"], params["bq"])
    wk, bk = _pack_qkv_weight(params["wk"], params["bk"])
    wv, bv = _pack_qkv_weight(params["wv"], params["bv"])
    w_qkv = jnp.stack([wq, wk, wv]).astype(matmul_dtype)        # (3, D_PAD, HP)
    b_qkv = jnp.stack([bq, bk, bv])                             # (3, 1, HP) f32
    w_o, b_o = _pack_out_weight(params["wo"], params["bo"])
    w_o = w_o.astype(matmul_dtype)                              # (HP, D_OUT_PAD)

    def prep(x):  # flatten batch into the matmul M dim, pad features to 128 lanes
        x2 = x.reshape(B * S, D).astype(matmul_dtype)
        return jnp.pad(x2, ((0, 0), (0, D_PAD - D)))

    qf, kf, vf = prep(q), prep(k), prep(v)

    # 2-wide "parallel" batch split when possible (keeps both v7x TensorCores busy);
    # projections inside a step run over all gb*S rows at once.
    nb = 2 if (B % 2 == 0 and B >= 2) else 1
    gb = B // nb
    rows = gb * S

    row_in_spec = pl.BlockSpec((rows, D_PAD), lambda i: (i, 0))
    row_out_spec = pl.BlockSpec((rows, D_OUT_PAD), lambda i: (i, 0))

    def full(shape):
        return pl.BlockSpec(shape, lambda i, _s=shape: tuple(0 for _ in _s))

    kernel = functools.partial(_mha_kernel, gb=gb, seq=S, heads=HEADS,
                               dk_pad=DK_PAD, scale=1.0 / math.sqrt(D_K))

    out_pad = pl.pallas_call(
        kernel,
        out_shape=jax.ShapeDtypeStruct((B * S, D_OUT_PAD), jnp.float32),
        grid_spec=pltpu.PrefetchScalarGridSpec(
            num_scalar_prefetch=0,
            grid=(nb,),
            in_specs=[
                row_in_spec, row_in_spec, row_in_spec,   # q, k, v (flattened rows, padded lanes)
                full((3, D_PAD, HP)),                    # fused pre-transposed Wq/Wk/Wv
                full((3, 1, HP)),                        # fused biases
                full((HP, D_OUT_PAD)),                   # pre-transposed padded Wo
                full((1, D_OUT_PAD)),                    # padded bo
            ],
            out_specs=row_out_spec,
        ),
        compiler_params=pltpu.CompilerParams(
            dimension_semantics=("parallel",)),
    )(qf, kf, vf, w_qkv, b_qkv, w_o, b_o)

    return out_pad[:, :D].reshape(B, S, D).astype(q.dtype)


def _reference(q, k, v, params):
    """Pure-JAX reference mirroring the PyTorch forward (eval mode)."""
    B, S, D = q.shape

    def lin(x, w, b):
        return x @ w.T + b

    qp = lin(q, params["wq"], params["bq"]).reshape(B, S, HEADS, D_K).transpose(0, 2, 1, 3)
    kp = lin(k, params["wk"], params["bk"]).reshape(B, S, HEADS, D_K).transpose(0, 2, 1, 3)
    vp = lin(v, params["wv"], params["bv"]).reshape(B, S, HEADS, D_K).transpose(0, 2, 1, 3)

    scores = jnp.einsum("bhqd,bhkd->bhqk", qp, kp) / math.sqrt(D_K)
    scores = jax.nn.softmax(scores, axis=-1)
    out = jnp.einsum("bhqk,bhkd->bhqd", scores, vp)
    concat = out.transpose(0, 2, 1, 3).reshape(B, S, D)
    return lin(concat, params["wo"], params["bo"])


def init_params(key):
    ks = jax.random.split(key, 8)
    bound = 1.0 / math.sqrt(D_MODEL)  # nn.Linear default init range

    def u(k, shape):
        return jax.random.uniform(k, shape, jnp.float32, -bound, bound)

    return {
        "wq": u(ks[0], (D_MODEL, D_MODEL)), "bq": u(ks[1], (D_MODEL,)),
        "wk": u(ks[2], (D_MODEL, D_MODEL)), "bk": u(ks[3], (D_MODEL,)),
        "wv": u(ks[4], (D_MODEL, D_MODEL)), "bv": u(ks[5], (D_MODEL,)),
        "wo": u(ks[6], (D_MODEL, D_MODEL)), "bo": u(ks[7], (D_MODEL,)),
    }


if __name__ == "__main__":
    key = jax.random.PRNGKey(0)
    k_p, k_q, k_k, k_v = jax.random.split(key, 4)

    B, S = 2, 8
    params = init_params(k_p)
    q = jax.random.normal(k_q, (B, S, D_MODEL), jnp.float32)
    k = jax.random.normal(k_k, (B, S, D_MODEL), jnp.float32)
    v = jax.random.normal(k_v, (B, S, D_MODEL), jnp.float32)

    out = multi_head_attention(q, k, v, params)
    out = jax.block_until_ready(out)

    ref = _reference(q, k, v, params)
    assert out.shape == (B, S, D_MODEL)
    # tolerance covers the approx-reciprocal softmax normalization (EUP vrcp)
    assert jnp.allclose(out, ref, atol=2e-3, rtol=2e-3), "mismatch vs reference"

    print("KERNEL_OK")
</pallas_src>

<mosaic_0001>
module attributes {stable_mosaic.version = 11 : i64} {
  func.func @_mha_kernel(%arg0: i32, %arg1: memref<8x128xf32, #tpu.memory_space<vmem>>, %arg2: memref<8x128xf32, #tpu.memory_space<vmem>>, %arg3: memref<8x128xf32, #tpu.memory_space<vmem>>, %arg4: memref<3x128x256xf32, #tpu.memory_space<vmem>>, %arg5: memref<3x1x256xf32, #tpu.memory_space<vmem>>, %arg6: memref<256x128xf32, #tpu.memory_space<vmem>>, %arg7: memref<1x128xf32, #tpu.memory_space<vmem>>, %arg8: memref<8x128xf32, #tpu.memory_space<vmem>>) attributes {dimension_semantics = [#tpu.dimension_semantics<parallel>], iteration_bounds = array<i64: 2>, scalar_prefetch = 0 : i64, scratch_operands = 0 : i64, tpu.core_type = #tpu.core_type<tc>, window_params = [{transform_indices = @transform_0, window_bounds = array<i64: 8, 128>}, {transform_indices = @transform_1, window_bounds = array<i64: 8, 128>}, {transform_indices = @transform_2, window_bounds = array<i64: 8, 128>}, {pipeline_mode = #tpu.pipeline_mode<synchronous>, transform_indices = @transform_3, window_bounds = array<i64: 3, 128, 256>}, {pipeline_mode = #tpu.pipeline_mode<synchronous>, transform_indices = @transform_4, window_bounds = array<i64: 3, 1, 256>}, {pipeline_mode = #tpu.pipeline_mode<synchronous>, transform_indices = @transform_5, window_bounds = array<i64: 256, 128>}, {pipeline_mode = #tpu.pipeline_mode<synchronous>, transform_indices = @transform_6, window_bounds = array<i64: 1, 128>}, {transform_indices = @transform_7, window_bounds = array<i64: 8, 128>}]} {
    %c0 = arith.constant 0 : index
    %c0_0 = arith.constant 0 : index
    %0 = vector.load %arg1[%c0, %c0_0] : memref<8x128xf32, #tpu.memory_space<vmem>>, vector<8x128xf32>
    %c0_1 = arith.constant 0 : index
    %c0_2 = arith.constant 0 : index
    %c0_3 = arith.constant 0 : index
    %1 = vector.load %arg4[%c0_1, %c0_2, %c0_3] : memref<3x128x256xf32, #tpu.memory_space<vmem>>, vector<1x128x256xf32>
    %2 = vector.shape_cast %1 : vector<1x128x256xf32> to vector<128x256xf32>
    %cst = arith.constant dense<0.000000e+00> : vector<8x256xf32>
    %3 = tpu.matmul %0, %2, %cst {dimension_numbers = #tpu.dot_dimension_numbers<[1], [0], [0], [1], [0, 0, 1, 1], [], []>} : vector<8x128xf32>, vector<128x256xf32>, vector<8x256xf32> -> vector<8x256xf32>
    %c0_4 = arith.constant 0 : index
    %c0_5 = arith.constant 0 : index
    %c0_6 = arith.constant 0 : index
    %4 = vector.load %arg5[%c0_4, %c0_5, %c0_6] : memref<3x1x256xf32, #tpu.memory_space<vmem>>, vector<1x1x256xf32>
    %5 = vector.shape_cast %4 : vector<1x1x256xf32> to vector<1x256xf32>
    %6 = vector.broadcast %5 : vector<1x256xf32> to vector<8x256xf32>
    %7 = arith.addf %3, %6 : vector<8x256xf32>
    %c0_7 = arith.constant 0 : index
    %c0_8 = arith.constant 0 : index
    %8 = vector.load %arg2[%c0_7, %c0_8] : memref<8x128xf32, #tpu.memory_space<vmem>>, vector<8x128xf32>
    %c1 = arith.constant 1 : index
    %c0_9 = arith.constant 0 : index
    %c0_10 = arith.constant 0 : index
    %9 = vector.load %arg4[%c1, %c0_9, %c0_10] : memref<3x128x256xf32, #tpu.memory_space<vmem>>, vector<1x128x256xf32>
    %10 = vector.shape_cast %9 : vector<1x128x256xf32> to vector<128x256xf32>
    %cst_11 = arith.constant dense<0.000000e+00> : vector<8x256xf32>
    %11 = tpu.matmul %8, %10, %cst_11 {dimension_numbers = #tpu.dot_dimension_numbers<[1], [0], [0], [1], [0, 0, 1, 1], [], []>} : vector<8x128xf32>, vector<128x256xf32>, vector<8x256xf32> -> vector<8x256xf32>
    %c1_12 = arith.constant 1 : index
    %c0_13 = arith.constant 0 : index
    %c0_14 = arith.constant 0 : index
    %12 = vector.load %arg5[%c1_12, %c0_13, %c0_14] : memref<3x1x256xf32, #tpu.memory_space<vmem>>, vector<1x1x256xf32>
    %13 = vector.shape_cast %12 : vector<1x1x256xf32> to vector<1x256xf32>
    %14 = vector.broadcast %13 : vector<1x256xf32> to vector<8x256xf32>
    %15 = arith.addf %11, %14 : vector<8x256xf32>
    %c0_15 = arith.constant 0 : index
    %c0_16 = arith.constant 0 : index
    %16 = vector.load %arg3[%c0_15, %c0_16] : memref<8x128xf32, #tpu.memory_space<vmem>>, vector<8x128xf32>
    %c2 = arith.constant 2 : index
    %c0_17 = arith.constant 0 : index
    %c0_18 = arith.constant 0 : index
    %17 = vector.load %arg4[%c2, %c0_17, %c0_18] : memref<3x128x256xf32, #tpu.memory_space<vmem>>, vector<1x128x256xf32>
    %18 = vector.shape_cast %17 : vector<1x128x256xf32> to vector<128x256xf32>
    %cst_19 = arith.constant dense<0.000000e+00> : vector<8x256xf32>
    %19 = tpu.matmul %16, %18, %cst_19 {dimension_numbers = #tpu.dot_dimension_numbers<[1], [0], [0], [1], [0, 0, 1, 1], [], []>} : vector<8x128xf32>, vector<128x256xf32>, vector<8x256xf32> -> vector<8x256xf32>
    %c2_20 = arith.constant 2 : index
    %c0_21 = arith.constant 0 : index
    %c0_22 = arith.constant 0 : index
    %20 = vector.load %arg5[%c2_20, %c0_21, %c0_22] : memref<3x1x256xf32, #tpu.memory_space<vmem>>, vector<1x1x256xf32>
    %21 = vector.shape_cast %20 : vector<1x1x256xf32> to vector<1x256xf32>
    %22 = vector.broadcast %21 : vector<1x256xf32> to vector<8x256xf32>
    %23 = arith.addf %19, %22 : vector<8x256xf32>
    %24 = vector.extract_strided_slice %7 {offsets = [0, 0], sizes = [8, 128], strides = [1, 1]} : vector<8x256xf32> to vector<8x128xf32>
    %25 = vector.extract_strided_slice %15 {offsets = [0, 0], sizes = [8, 128], strides = [1, 1]} : vector<8x256xf32> to vector<8x128xf32>
    %26 = vector.extract_strided_slice %23 {offsets = [0, 0], sizes = [8, 128], strides = [1, 1]} : vector<8x256xf32> to vector<8x128xf32>
    %cst_23 = arith.constant dense<0.000000e+00> : vector<8x8xf32>
    %27 = tpu.matmul %24, %25, %cst_23 {dimension_numbers = #tpu.dot_dimension_numbers<[1], [1], [0], [0], [0, 0, 1, 0], [], []>} : vector<8x128xf32>, vector<8x128xf32>, vector<8x8xf32> -> vector<8x8xf32>
    %cst_24 = arith.constant 2.000000e-01 : f32
    %28 = vector.broadcast %cst_24 : f32 to vector<8x8xf32>
    %29 = arith.mulf %27, %28 : vector<8x8xf32>
    %cst_25 = arith.constant dense<0xFF800000> : vector<8xf32>
    %30 = vector.multi_reduction <maximumf>, %29, %cst_25 [1] : vector<8x8xf32> to vector<8xf32>
    %31 = vector.shape_cast %30 : vector<8xf32> to vector<8x1xf32>
    %32 = vector.broadcast %31 : vector<8x1xf32> to vector<8x8xf32>
    %33 = arith.subf %29, %32 : vector<8x8xf32>
    %34 = math.exp %33 : vector<8x8xf32>
    %cst_26 = arith.constant dense<0.000000e+00> : vector<8xf32>
    %35 = vector.multi_reduction <add>, %34, %cst_26 [1] : vector<8x8xf32> to vector<8xf32>
    %36 = vector.shape_cast %35 : vector<8xf32> to vector<8x1xf32>
    %37 = tpu.reciprocal %36 {approx = true} : vector<8x1xf32> -> vector<8x1xf32>
    %38 = vector.broadcast %37 : vector<8x1xf32> to vector<8x8xf32>
    %39 = arith.mulf %34, %38 : vector<8x8xf32>
    %cst_27 = arith.constant dense<0.000000e+00> : vector<8x128xf32>
    %40 = tpu.matmul %39, %26, %cst_27 {dimension_numbers = #tpu.dot_dimension_numbers<[1], [0], [0], [1], [0, 0, 1, 1], [], []>} : vector<8x8xf32>, vector<8x128xf32>, vector<8x128xf32> -> vector<8x128xf32>
    %41 = vector.extract_strided_slice %7 {offsets = [0, 128], sizes = [8, 128], strides = [1, 1]} : vector<8x256xf32> to vector<8x128xf32>
    %42 = vector.extract_strided_slice %15 {offsets = [0, 128], sizes = [8, 128], strides = [1, 1]} : vector<8x256xf32> to vector<8x128xf32>
    %43 = vector.extract_strided_slice %23 {offsets = [0, 128], sizes = [8, 128], strides = [1, 1]} : vector<8x256xf32> to vector<8x128xf32>
    %cst_28 = arith.constant dense<0.000000e+00> : vector<8x8xf32>
    %44 = tpu.matmul %41, %42, %cst_28 {dimension_numbers = #tpu.dot_dimension_numbers<[1], [1], [0], [0], [0, 0, 1, 0], [], []>} : vector<8x128xf32>, vector<8x128xf32>, vector<8x8xf32> -> vector<8x8xf32>
    %cst_29 = arith.constant 2.000000e-01 : f32
    %45 = vector.broadcast %cst_29 : f32 to vector<8x8xf32>
    %46 = arith.mulf %44, %45 : vector<8x8xf32>
    %cst_30 = arith.constant dense<0xFF800000> : vector<8xf32>
    %47 = vector.multi_reduction <maximumf>, %46, %cst_30 [1] : vector<8x8xf32> to vector<8xf32>
    %48 = vector.shape_cast %47 : vector<8xf32> to vector<8x1xf32>
    %49 = vector.broadcast %48 : vector<8x1xf32> to vector<8x8xf32>
    %50 = arith.subf %46, %49 : vector<8x8xf32>
    %51 = math.exp %50 : vector<8x8xf32>
    %cst_31 = arith.constant dense<0.000000e+00> : vector<8xf32>
    %52 = vector.multi_reduction <add>, %51, %cst_31 [1] : vector<8x8xf32> to vector<8xf32>
    %53 = vector.shape_cast %52 : vector<8xf32> to vector<8x1xf32>
    %54 = tpu.reciprocal %53 {approx = true} : vector<8x1xf32> -> vector<8x1xf32>
    %55 = vector.broadcast %54 : vector<8x1xf32> to vector<8x8xf32>
    %56 = arith.mulf %51, %55 : vector<8x8xf32>
    %cst_32 = arith.constant dense<0.000000e+00> : vector<8x128xf32>
    %57 = tpu.matmul %56, %43, %cst_32 {dimension_numbers = #tpu.dot_dimension_numbers<[1], [0], [0], [1], [0, 0, 1, 1], [], []>} : vector<8x8xf32>, vector<8x128xf32>, vector<8x128xf32> -> vector<8x128xf32>
    %58 = tpu.concatenate %40, %57 in 1 : vector<8x128xf32>, vector<8x128xf32> -> vector<8x256xf32>
    %c0_33 = arith.constant 0 : index
    %c0_34 = arith.constant 0 : index
    %59 = vector.load %arg6[%c0_33, %c0_34] : memref<256x128xf32, #tpu.memory_space<vmem>>, vector<256x128xf32>
    %cst_35 = arith.constant dense<0.000000e+00> : vector<8x128xf32>
    %60 = tpu.matmul %58, %59, %cst_35 {dimension_numbers = #tpu.dot_dimension_numbers<[1], [0], [0], [1], [0, 0, 1, 1], [], []>} : vector<8x256xf32>, vector<256x128xf32>, vector<8x128xf32> -> vector<8x128xf32>
    %c0_36 = arith.constant 0 : index
    %c0_37 = arith.constant 0 : index
    %61 = vector.load %arg7[%c0_36, %c0_37] : memref<1x128xf32, #tpu.memory_space<vmem>>, vector<1x128xf32>
    %62 = vector.broadcast %61 : vector<1x128xf32> to vector<8x128xf32>
    %63 = arith.addf %60, %62 : vector<8x128xf32>
    %c0_38 = arith.constant 0 : index
    %c0_39 = arith.constant 0 : index
    %64 = vector.load %arg8[%c0_38, %c0_39] : memref<8x128xf32, #tpu.memory_space<vmem>>, vector<8x128xf32>
    tpu.vector_store %arg8[%c0_38, %c0_39], %63 {strides = array<i32>} : memref<8x128xf32, #tpu.memory_space<vmem>>, vector<8x128xf32>,
    return
  }
  func.func @transform_0(%arg0: i32) -> (i32, i32) {
    %c0_i32 = arith.constant 0 : i32
    %c0_i32_0 = arith.constant 0 : i32
    return %arg0, %c0_i32 : i32, i32
  }
  func.func @transform_1(%arg0: i32) -> (i32, i32) {
    %c0_i32 = arith.constant 0 : i32
    %c0_i32_0 = arith.constant 0 : i32
    return %arg0, %c0_i32 : i32, i32
  }
  func.func @transform_2(%arg0: i32) -> (i32, i32) {
    %c0_i32 = arith.constant 0 : i32
    %c0_i32_0 = arith.constant 0 : i32
    return %arg0, %c0_i32 : i32, i32
  }
  func.func @transform_3(%arg0: i32) -> (i32, i32, i32) {
    %c0_i32 = arith.constant 0 : i32
    %c0_i32_0 = arith.constant 0 : i32
    %c0_i32_1 = arith.constant 0 : i32
    %c0_i32_2 = arith.constant 0 : i32
    return %c0_i32, %c0_i32_0, %c0_i32_1 : i32, i32, i32
  }
  func.func @transform_4(%arg0: i32) -> (i32, i32, i32) {
    %c0_i32 = arith.constant 0 : i32
    %c0_i32_0 = arith.constant 0 : i32
    %c0_i32_1 = arith.constant 0 : i32
    %c0_i32_2 = arith.constant 0 : i32
    return %c0_i32, %c0_i32_0, %c0_i32_1 : i32, i32, i32
  }
  func.func @transform_5(%arg0: i32) -> (i32, i32) {
    %c0_i32 = arith.constant 0 : i32
    %c0_i32_0 = arith.constant 0 : i32
    %c0_i32_1 = arith.constant 0 : i32
    return %c0_i32, %c0_i32_0 : i32, i32
  }
  func.func @transform_6(%arg0: i32) -> (i32, i32) {
    %c0_i32 = arith.constant 0 : i32
    %c0_i32_0 = arith.constant 0 : i32
    %c0_i32_1 = arith.constant 0 : i32
    return %c0_i32, %c0_i32_0 : i32, i32
  }
  func.func @transform_7(%arg0: i32) -> (i32, i32) {
    %c0_i32 = arith.constant 0 : i32
    %c0_i32_0 = arith.constant 0 : i32
    return %arg0, %c0_i32 : i32, i32
  }
}

</mosaic_0001>

<llo_original>
// kernel: tpu_custom_call.1
$region0: #{tpu_custom_call.1}
  #allocation0 [shape = 'u32[]', space=smem, size = 0x4, offset = 0x4, fixed_abs, tag = 'smem constant byte address 0x4 - core index']
  #allocation1 [shape = 'u32[144,128]{1,0:T(1,128)}', space=vmem, size = 0x12000, scoped, tag = 'internal scratch']
  %s0 = inlined_call_operand.hbm [shape: f32[16,128], index: 0, kind: input, shape index: {}]
  %s1 = inlined_call_operand.hbm [shape: f32[16,128], index: 1, kind: input, shape index: {}]
  %s2 = inlined_call_operand.hbm [shape: f32[16,128], index: 2, kind: input, shape index: {}]
  %s3 = inlined_call_operand.hbm [shape: f32[3,128,256], index: 3, kind: input, shape index: {}]
  %s4 = inlined_call_operand.vmem [shape: f32[3,1,256], index: 4, kind: input, shape index: {}]
  %s5 = inlined_call_operand.hbm [shape: f32[256,128], index: 5, kind: input, shape index: {}]
  %s6 = inlined_call_operand.vmem [shape: f32[1,128], index: 6, kind: input, shape index: {}]
  %s7 = inlined_call_operand.hbm [shape: f32[16,128], index: 7, kind: output, shape index: {}]
  %s8 = sld [smem:[#allocation0]]
  $region81: #{tpu_custom_call.1} parent=0
    _
  %s10 = ssub.s32 1, %s8
  %s11 = scalar_select 0, %s10, %s8
  $region1: #{tpu_custom_call.1} parent=0
    #allocation2 [shape = 'u8[8192]{0}', space=vmem, size = 0x2000, scoped, tag = 'input window, operand 0']
    #allocation3 [shape = 's32[2]{0}', space=sflag, size = 0x8, scoped, tag = 'scoped memory for tpu_custom_call.1']
    #allocation4 [shape = 's32[2]{0}', space=sflag, size = 0x8, scoped, tag = 'scoped memory for tpu_custom_call.1']
    #allocation5 [shape = 'u8[8192]{0}', space=vmem, size = 0x2000, scoped, tag = 'input window, operand 1']
    #allocation6 [shape = 's32[2]{0}', space=sflag, size = 0x8, scoped, tag = 'scoped memory for tpu_custom_call.1']
    #allocation7 [shape = 'u8[8192]{0}', space=vmem, size = 0x2000, scoped, tag = 'input window, operand 2']
    #allocation8 [shape = 'u8[393216]{0}', space=vmem, size = 0x60000, scoped, tag = 'input window, operand 3, single buffered']
    #allocation9 [shape = 's32[1]{0}', space=sflag, size = 0x4, scoped, tag = 'scoped memory for tpu_custom_call.1']
    #allocation10 [shape = 'u8[131072]{0}', space=vmem, size = 0x20000, scoped, tag = 'input window, operand 5, single buffered']
    #allocation11 [shape = 'u8[8192]{0}', space=vmem, size = 0x2000, scoped, tag = 'output window, operand 0']
    %12 = vsyncpa [#allocation3], 0
    %s13 = scalar_lea.sflag [#allocation3], 1
    %14 = vsyncpa %s13, 0
    %15 = vsyncpa [#allocation6], 0
    %s16 = scalar_lea.sflag [#allocation6], 1
    %17 = vsyncpa %s16, 0
    %18 = vsyncpa [#allocation9], 0
    %19 = vsyncpa [#allocation4], 0
    %s20 = scalar_lea.sflag [#allocation4], 1
    %21 = vsyncpa %s20, 0
    loop: start=0, step=1, limit=4
    $region2: #{tpu_custom_call.1} parent=1 // loop_pre_header
      _
    $region3: #{tpu_custom_call.1} parent=1 // loop_header
      %s23 = sphi 0, %s27
      %p24 = scmp.ge.s32.totalorder %s23, 4
      %s33 = sphi 0, %s35
      %s36 = sphi 0, %s33
      %s37 = sphi 0, %s36
      %s53 = sphi 0, %s37
      %s59 = sphi 0, %s61
      %s62 = sphi 0, %s59
      %s63 = sphi 0, %s62
      %s79 = sphi 0, %s63
      %s85 = sphi 0, %s87
      %s88 = sphi 0, %s85
      %s89 = sphi 0, %s88
      %s105 = sphi 0, %s89
      %s109 = sphi 0, %s109
      %s111 = sphi 0, %s109
      %s112 = sphi 0, %s111
      %s126 = sphi 0, %s112
      %s130 = sphi 0, %s130
      %s132 = sphi 0, %s130
      %s133 = sphi 0, %s132
      %s147 = sphi 0, %s133
      %s151 = sphi 0, %s151
      %s153 = sphi 0, %s151
      %s154 = sphi 0, %s153
      %s168 = sphi 0, %s154
      %s172 = sphi 0, %s172
      %s174 = sphi 0, %s172
      %s175 = sphi 0, %s174
      %s189 = sphi 0, %s175
      %s195 = sphi 0, %s197
      %s198 = sphi 0, %s195
      %s199 = sphi 0, %s198
      %s215 = sphi 0, %s199
    $region4: #{tpu_custom_call.1} parent=1 // loop_header_branch
      %26 = sbr.rel (%p24) target = $region8
    $region5: #{tpu_custom_call.1} parent=1 // loop_body
      %s28 = ssub.s32 %s23, 1
      %s29 = ssub.s32 %s23, 2
      %s30 = sadd.s32 %s23, 1
      %s31 = ssub.s32 %s23, %s30
      %p32 = scmp.eq.s32.totalorder %s31, 0
      %s34 = sadd.s32 %s33, 1
      %s35 = scalar_select %p32, %s33, %s34
      %p38 = pneg %p32
      %p39 = scmp.eq.s32.totalorder %s23, 1
      %p40 = por %p38, %p39
      %p41 = scmp.ne.s32.totalorder %s33, %s36
      %p42 = scmp.eq.s32.totalorder %s23, 0
      %p43 = por %p41, %p42
      %p44 = scmp.ne.s32.totalorder %s33, %s36
      %p45 = scmp.eq.s32.totalorder %s28, 1
      %p46 = por %p44, %p45
      %p47 = scmp.ne.s32.totalorder %s36, %s37
      %p48 = scmp.eq.s32.totalorder %s28, 0
      %p49 = por %p47, %p48
      %p50 = scmp.ne.s32.totalorder %s36, %s37
      %p51 = scmp.eq.s32.totalorder %s29, 1
      %p52 = por %p50, %p51
      %p54 = scmp.ne.s32.totalorder %s37, %s53
      %p55 = scmp.eq.s32.totalorder %s29, 0
      %p56 = por %p54, %p55
      %s57 = ssub.s32 %s23, %s30
      %p58 = scmp.eq.s32.totalorder %s57, 0
      %s60 = sadd.s32 %s59, 1
      %s61 = scalar_select %p58, %s59, %s60
      %p64 = pneg %p58
      %p65 = scmp.eq.s32.totalorder %s23, 1
      %p66 = por %p64, %p65
      %p67 = scmp.ne.s32.totalorder %s59, %s62
      %p68 = scmp.eq.s32.totalorder %s23, 0
      %p69 = por %p67, %p68
      %p70 = scmp.ne.s32.totalorder %s59, %s62
      %p71 = scmp.eq.s32.totalorder %s28, 1
      %p72 = por %p70, %p71
      %p73 = scmp.ne.s32.totalorder %s62, %s63
      %p74 = scmp.eq.s32.totalorder %s28, 0
      %p75 = por %p73, %p74
      %p76 = scmp.ne.s32.totalorder %s62, %s63
      %p77 = scmp.eq.s32.totalorder %s29, 1
      %p78 = por %p76, %p77
      %p80 = scmp.ne.s32.totalorder %s63, %s79
      %p81 = scmp.eq.s32.totalorder %s29, 0
      %p82 = por %p80, %p81
      %s83 = ssub.s32 %s23, %s30
      %p84 = scmp.eq.s32.totalorder %s83, 0
      %s86 = sadd.s32 %s85, 1
      %s87 = scalar_select %p84, %s85, %s86
      %p90 = pneg %p84
      %p91 = scmp.eq.s32.totalorder %s23, 1
      %p92 = por %p90, %p91
      %p93 = scmp.ne.s32.totalorder %s85, %s88
      %p94 = scmp.eq.s32.totalorder %s23, 0
      %p95 = por %p93, %p94
      %p96 = scmp.ne.s32.totalorder %s85, %s88
      %p97 = scmp.eq.s32.totalorder %s28, 1
      %p98 = por %p96, %p97
      %p99 = scmp.ne.s32.totalorder %s88, %s89
      %p100 = scmp.eq.s32.totalorder %s28, 0
      %p101 = por %p99, %p100
      %p102 = scmp.ne.s32.totalorder %s88, %s89
      %p103 = scmp.eq.s32.totalorder %s29, 1
      %p104 = por %p102, %p103
      %p106 = scmp.ne.s32.totalorder %s89, %s105
      %p107 = scmp.eq.s32.totalorder %s29, 0
      %p108 = por %p106, %p107
      %s110 = sadd.s32 %s109, 1
      %p113 = scmp.eq.s32.totalorder %s23, 1
      %p114 = scmp.ne.s32.totalorder %s109, %s111
      %p115 = scmp.eq.s32.totalorder %s23, 0
      %p116 = por %p114, %p115
      %p117 = scmp.ne.s32.totalorder %s109, %s111
      %p118 = scmp.eq.s32.totalorder %s28, 1
      %p119 = por %p117, %p118
      %p120 = scmp.ne.s32.totalorder %s111, %s112
      %p121 = scmp.eq.s32.totalorder %s28, 0
      %p122 = por %p120, %p121
      %p123 = scmp.ne.s32.totalorder %s111, %s112
      %p124 = scmp.eq.s32.totalorder %s29, 1
      %p125 = por %p123, %p124
      %p127 = scmp.ne.s32.totalorder %s112, %s126
      %p128 = scmp.eq.s32.totalorder %s29, 0
      %p129 = por %p127, %p128
      %s131 = sadd.s32 %s130, 1
      %p134 = scmp.eq.s32.totalorder %s23, 1
      %p135 = scmp.ne.s32.totalorder %s130, %s132
      %p136 = scmp.eq.s32.totalorder %s23, 0
      %p137 = por %p135, %p136
      %p138 = scmp.ne.s32.totalorder %s130, %s132
      %p139 = scmp.eq.s32.totalorder %s28, 1
      %p140 = por %p138, %p139
      %p141 = scmp.ne.s32.totalorder %s132, %s133
      %p142 = scmp.eq.s32.totalorder %s28, 0
      %p143 = por %p141, %p142
      %p144 = scmp.ne.s32.totalorder %s132, %s133
      %p145 = scmp.eq.s32.totalorder %s29, 1
      %p146 = por %p144, %p145
      %p148 = scmp.ne.s32.totalorder %s133, %s147
      %p149 = scmp.eq.s32.totalorder %s29, 0
      %p150 = por %p148, %p149
      %s152 = sadd.s32 %s151, 1
      %p155 = scmp.eq.s32.totalorder %s23, 1
      %p156 = scmp.ne.s32.totalorder %s151, %s153
      %p157 = scmp.eq.s32.totalorder %s23, 0
      %p158 = por %p156, %p157
      %p159 = scmp.ne.s32.totalorder %s151, %s153
      %p160 = scmp.eq.s32.totalorder %s28, 1
      %p161 = por %p159, %p160
      %p162 = scmp.ne.s32.totalorder %s153, %s154
      %p163 = scmp.eq.s32.totalorder %s28, 0
      %p164 = por %p162, %p163
      %p165 = scmp.ne.s32.totalorder %s153, %s154
      %p166 = scmp.eq.s32.totalorder %s29, 1
      %p167 = por %p165, %p166
      %p169 = scmp.ne.s32.totalorder %s154, %s168
      %p170 = scmp.eq.s32.totalorder %s29, 0
      %p171 = por %p169, %p170
      %s173 = sadd.s32 %s172, 1
      %p176 = scmp.eq.s32.totalorder %s23, 1
      %p177 = scmp.ne.s32.totalorder %s172, %s174
      %p178 = scmp.eq.s32.totalorder %s23, 0
      %p179 = por %p177, %p178
      %p180 = scmp.ne.s32.totalorder %s172, %s174
      %p181 = scmp.eq.s32.totalorder %s28, 1
      %p182 = por %p180, %p181
      %p183 = scmp.ne.s32.totalorder %s174, %s175
      %p184 = scmp.eq.s32.totalorder %s28, 0
      %p185 = por %p183, %p184
      %p186 = scmp.ne.s32.totalorder %s174, %s175
      %p187 = scmp.eq.s32.totalorder %s29, 1
      %p188 = por %p186, %p187
      %p190 = scmp.ne.s32.totalorder %s175, %s189
      %p191 = scmp.eq.s32.totalorder %s29, 0
      %p192 = por %p190, %p191
      %s193 = ssub.s32 %s23, %s30
      %p194 = scmp.eq.s32.totalorder %s193, 0
      %s196 = sadd.s32 %s195, 1
      %s197 = scalar_select %p194, %s195, %s196
      %p200 = pneg %p194
      %p201 = scmp.eq.s32.totalorder %s23, 1
      %p202 = por %p200, %p201
      %p203 = scmp.ne.s32.totalorder %s195, %s198
      %p204 = scmp.eq.s32.totalorder %s23, 0
      %p205 = por %p203, %p204
      %p206 = scmp.ne.s32.totalorder %s195, %s198
      %p207 = scmp.eq.s32.totalorder %s28, 1
      %p208 = por %p206, %p207
      %p209 = scmp.ne.s32.totalorder %s198, %s199
      %p210 = scmp.eq.s32.totalorder %s28, 0
      %p211 = por %p209, %p210
      %p212 = scmp.ne.s32.totalorder %s198, %s199
      %p213 = scmp.eq.s32.totalorder %s29, 1
      %p214 = por %p212, %p213
      %p216 = scmp.ne.s32.totalorder %s199, %s215
      %p217 = scmp.eq.s32.totalorder %s29, 0
      %p218 = por %p216, %p217
      %p219 = scmp.le.s32.totalorder 1, %s23
      %p220 = scmp.lt.s32.totalorder %s23, 3
      %p221 = pnand %p219, %p220
      %p222 = pneg %p221
      // Predicated region
      $region9: #{tpu_custom_call.1} parent=5 // pred_check
        _
      $region10: #{tpu_custom_call.1} parent=5 // pred_check_branch
        %224 = sbr.rel (%p221) target = $region12
      $region11: #{tpu_custom_call.1} parent=5 // pred_region
        %s225 = ssub.s32 %s23, 1
        // Predicated region
        $region13: #{tpu_custom_call.1} parent=11 // pred_check
          %p226 = pneg %p122
        $region14: #{tpu_custom_call.1} parent=11 // pred_check_branch
          %228 = sbr.rel (%p226) target = $region16
        $region15: #{tpu_custom_call.1} parent=11 // pred_region
          %s230 = ssub.s32 12288, 12288
          %231 = vsyncadd [#allocation9], %s230
          %s232 = sshll.u32 [#allocation8], 4
          %s233 = int_to_ptr.vmem [resolvable:$true] %s232
          %238 = dma.hbm_to_vmem [thread:$0]  %s3, 12288, %s233, [#allocation9], 256, 256, 16
        $region16: #{tpu_custom_call.1} parent=11 // pred_fallthru
          _
        // Predicated region
        $region17: #{tpu_custom_call.1} parent=11 // pred_check
          %p239 = pneg %p143
        $region18: #{tpu_custom_call.1} parent=11 // pred_check_branch
          %241 = sbr.rel (%p239) target = $region20
        $region19: #{tpu_custom_call.1} parent=11 // pred_region
          _
        $region20: #{tpu_custom_call.1} parent=11 // pred_fallthru
          _
        // Predicated region
        $region21: #{tpu_custom_call.1} parent=11 // pred_check
          %p242 = pneg %p164
        $region22: #{tpu_custom_call.1} parent=11 // pred_check_branch
          %244 = sbr.rel (%p242) target = $region24
        $region23: #{tpu_custom_call.1} parent=11 // pred_region
          %s246 = ssub.s32 4096, 4096
          %247 = vsyncadd [#allocation9], %s246
          %s248 = sshll.u32 [#allocation10], 4
          %s249 = int_to_ptr.vmem [resolvable:$true] %s248
          %254 = dma.hbm_to_vmem [thread:$0]  %s5, 4096, %s249, [#allocation9], 128, 128, 8
        $region24: #{tpu_custom_call.1} parent=11 // pred_fallthru
          _
        // Predicated region
        $region25: #{tpu_custom_call.1} parent=11 // pred_check
          %p255 = pneg %p185
        $region26: #{tpu_custom_call.1} parent=11 // pred_check_branch
          %257 = sbr.rel (%p255) target = $region28
        $region27: #{tpu_custom_call.1} parent=11 // pred_region
          _
        $region28: #{tpu_custom_call.1} parent=11 // pred_fallthru
          _
      $region12: #{tpu_custom_call.1} parent=5 // pred_fallthru
        _
      %p258 = scmp.lt.s32.totalorder %s23, 2
      // Predicated region
      $region29: #{tpu_custom_call.1} parent=5 // pred_check
        %p259 = pneg %p258
      $region30: #{tpu_custom_call.1} parent=5 // pred_check_branch
        %261 = sbr.rel (%p259) target = $region32
      $region31: #{tpu_custom_call.1} parent=5 // pred_region
        // Predicated region
        $region33: #{tpu_custom_call.1} parent=31 // pred_check
          %p262 = pneg %p43
        $region34: #{tpu_custom_call.1} parent=31 // pred_check_branch
          %264 = sbr.rel (%p262) target = $region36
        $region35: #{tpu_custom_call.1} parent=31 // pred_region
          %s265 = sand.u32 %s33, 1
          %s266 = scalar_lea.sflag [#allocation3], %s265
          %s267 = sand.u32 %s33, 1
          %s268 = smul.addr %s267, 8
          %s269 = scalar_lea.vmem [#allocation2], %s268
          %s271 = ssub.s32 128, 128
          %272 = vsyncadd %s266, %s271
          %s273 = smul.addr %s23, 128
          %s274 = scalar_lea.hbm %s0, %s273
          %s276 = sshll.u32 %s269, 4
          %s277 = int_to_ptr.vmem [resolvable:$true] %s276
          %279 = dma.hbm_to_vmem [thread:$0]  %s274, 128, %s277, %s266
        $region36: #{tpu_custom_call.1} parent=31 // pred_fallthru
          _
        // Predicated region
        $region37: #{tpu_custom_call.1} parent=31 // pred_check
          %p280 = pneg %p69
        $region38: #{tpu_custom_call.1} parent=31 // pred_check_branch
          %282 = sbr.rel (%p280) target = $region40
        $region39: #{tpu_custom_call.1} parent=31 // pred_region
          %s283 = sand.u32 %s23, 1
          %s284 = scalar_lea.sflag [#allocation6], %s283
          %s285 = sand.u32 %s59, 1
          %s286 = smul.addr %s285, 8
          %s287 = scalar_lea.vmem [#allocation5], %s286
          %s289 = ssub.s32 128, 128
          %290 = vsyncadd %s284, %s289
          %s291 = smul.addr %s23, 128
          %s292 = scalar_lea.hbm %s1, %s291
          %s294 = sshll.u32 %s287, 4
          %s295 = int_to_ptr.vmem [resolvable:$true] %s294
          %297 = dma.hbm_to_vmem [thread:$0]  %s292, 128, %s295, %s284
        $region40: #{tpu_custom_call.1} parent=31 // pred_fallthru
          _
        // Predicated region
        $region41: #{tpu_custom_call.1} parent=31 // pred_check
          %p298 = pneg %p95
        $region42: #{tpu_custom_call.1} parent=31 // pred_check_branch
          %300 = sbr.rel (%p298) target = $region44
        $region43: #{tpu_custom_call.1} parent=31 // pred_region
          %s301 = sand.u32 %s23, 1
          %s302 = scalar_lea.sflag [#allocation6], %s301
          %s303 = sand.u32 %s85, 1
          %s304 = smul.addr %s303, 8
          %s305 = scalar_lea.vmem [#allocation7], %s304
          %s307 = ssub.s32 128, 128
          %308 = vsyncadd %s302, %s307
          %s309 = smul.addr %s23, 128
          %s310 = scalar_lea.hbm %s2, %s309
          %s312 = sshll.u32 %s305, 4
          %s313 = int_to_ptr.vmem [resolvable:$true] %s312
          %315 = dma.hbm_to_vmem [thread:$0]  %s310, 128, %s313, %s302
        $region44: #{tpu_custom_call.1} parent=31 // pred_fallthru
          _
      $region32: #{tpu_custom_call.1} parent=5 // pred_fallthru
        _
      %p316 = scmp.le.s32.totalorder 1, %s23
      %p317 = scmp.lt.s32.totalorder %s23, 3
      %p318 = pnand %p316, %p317
      %p319 = pneg %p318
      // Predicated region
      $region45: #{tpu_custom_call.1} parent=5 // pred_check
        _
      $region46: #{tpu_custom_call.1} parent=5 // pred_check_branch
        %321 = sbr.rel (%p318) target = $region48
      $region47: #{tpu_custom_call.1} parent=5 // pred_region
        %s322 = ssub.s32 %s23, 1
        %s323 = sand.u32 %s36, 1
        %s324 = scalar_lea.sflag [#allocation3], %s323
        %s325 = sand.u32 %s36, 1
        %s326 = smul.addr %s325, 8
        %s327 = scalar_lea.vmem [#allocation2], %s326
        // Predicated region
        $region49: #{tpu_custom_call.1} parent=47 // pred_check
          %p328 = pneg %p49
        $region50: #{tpu_custom_call.1} parent=47 // pred_check_branch
          %330 = sbr.rel (%p328) target = $region52
        $region51: #{tpu_custom_call.1} parent=47 // pred_region
          %331 = dma.done %s324, 128
        $region52: #{tpu_custom_call.1} parent=47 // pred_fallthru
          _
        %s332 = sand.u32 %s28, 1
        %s333 = scalar_lea.sflag [#allocation6], %s332
        %s334 = sand.u32 %s62, 1
        %s335 = smul.addr %s334, 8
        %s336 = scalar_lea.vmem [#allocation5], %s335
        // Predicated region
        $region53: #{tpu_custom_call.1} parent=47 // pred_check
          %p337 = pneg %p75
        $region54: #{tpu_custom_call.1} parent=47 // pred_check_branch
          %339 = sbr.rel (%p337) target = $region56
        $region55: #{tpu_custom_call.1} parent=47 // pred_region
          %340 = dma.done %s333, 128
        $region56: #{tpu_custom_call.1} parent=47 // pred_fallthru
          _
        %s341 = sand.u32 %s28, 1
        %s342 = scalar_lea.sflag [#allocation6], %s341
        %s343 = sand.u32 %s88, 1
        %s344 = smul.addr %s343, 8
        %s345 = scalar_lea.vmem [#allocation7], %s344
        // Predicated region
        $region57: #{tpu_custom_call.1} parent=47 // pred_check
          %p346 = pneg %p101
        $region58: #{tpu_custom_call.1} parent=47 // pred_check_branch
          %348 = sbr.rel (%p346) target = $region60
        $region59: #{tpu_custom_call.1} parent=47 // pred_region
          %349 = dma.done %s342, 128
        $region60: #{tpu_custom_call.1} parent=47 // pred_fallthru
          _
        // Predicated region
        $region61: #{tpu_custom_call.1} parent=47 // pred_check
          %p350 = pneg %p122
        $region62: #{tpu_custom_call.1} parent=47 // pred_check_branch
          %352 = sbr.rel (%p350) target = $region64
        $region63: #{tpu_custom_call.1} parent=47 // pred_region
          %353 = dma.done [#allocation9], 12288
        $region64: #{tpu_custom_call.1} parent=47 // pred_fallthru
          _
        // Predicated region
        $region65: #{tpu_custom_call.1} parent=47 // pred_check
          %p354 = pneg %p164
        $region66: #{tpu_custom_call.1} parent=47 // pred_check_branch
          %356 = sbr.rel (%p354) target = $region68
        $region67: #{tpu_custom_call.1} parent=47 // pred_region
          %357 = dma.done [#allocation9], 4096
        $region68: #{tpu_custom_call.1} parent=47 // pred_fallthru
          _
        %s358 = sand.u32 %s36, 1
        %s359 = scalar_lea.sflag [#allocation3], %s358
        %s360 = sand.u32 %s36, 1
        %s361 = smul.addr %s360, 8
        %s362 = scalar_lea.vmem [#allocation2], %s361
        %p363 = pneg %p49
        %p364 = pneg %p46
        %s365 = sand.u32 %s28, 1
        %s366 = scalar_lea.sflag [#allocation6], %s365
        %s367 = sand.u32 %s62, 1
        %s368 = smul.addr %s367, 8
        %s369 = scalar_lea.vmem [#allocation5], %s368
        %p370 = pneg %p75
        %p371 = pneg %p72
        %s372 = sand.u32 %s28, 1
        %s373 = scalar_lea.sflag [#allocation6], %s372
        %s374 = sand.u32 %s88, 1
        %s375 = smul.addr %s374, 8
        %s376 = scalar_lea.vmem [#allocation7], %s375
        %p377 = pneg %p101
        %p378 = pneg %p98
        %p379 = pneg %p122
        %p380 = pneg %p119
        %p381 = pneg %p143
        %p382 = pneg %p140
        %p383 = pneg %p164
        %p384 = pneg %p161
        %p385 = pneg %p185
        %p386 = pneg %p182
        %p387 = pneg %p211
        %p388 = pneg %p208
        %s389 = sand.u32 %s198, 1
        %s390 = scalar_lea.sflag [#allocation4], %s389
        %s391 = sand.u32 %s198, 1
        %s392 = smul.addr %s391, 8
        %s393 = scalar_lea.vmem [#allocation11], %s392
        %v394 = vld [vmem:[%s327] sm:$0xff]
        %v395 = vld [vmem:[#allocation8] sm:$0xff]
        %v396 = vld [vmem:[#allocation8 + $0x8] sm:$0xff]
        %v397 = vld [vmem:[#allocation8 + $0x10] sm:$0xff]
        %v398 = vld [vmem:[#allocation8 + $0x18] sm:$0xff]
        %v399 = vld [vmem:[#allocation8 + $0x20] sm:$0xff]
        %v400 = vld [vmem:[#allocation8 + $0x28] sm:$0xff]
        %v401 = vld [vmem:[#allocation8 + $0x30] sm:$0xff]
        %v402 = vld [vmem:[#allocation8 + $0x38] sm:$0xff]
        %v403 = vld [vmem:[#allocation8 + $0x40] sm:$0xff]
        %v404 = vld [vmem:[#allocation8 + $0x48] sm:$0xff]
        %v405 = vld [vmem:[#allocation8 + $0x50] sm:$0xff]
        %v406 = vld [vmem:[#allocation8 + $0x58] sm:$0xff]
        %v407 = vld [vmem:[#allocation8 + $0x60] sm:$0xff]
        %v408 = vld [vmem:[#allocation8 + $0x68] sm:$0xff]
        %v409 = vld [vmem:[#allocation8 + $0x70] sm:$0xff]
        %v410 = vld [vmem:[#allocation8 + $0x78] sm:$0xff]
        %v411 = vld [vmem:[#allocation8 + $0x80] sm:$0xff]
        %v412 = vld [vmem:[#allocation8 + $0x88] sm:$0xff]
        %v413 = vld [vmem:[#allocation8 + $0x90] sm:$0xff]
        %v414 = vld [vmem:[#allocation8 + $0x98] sm:$0xff]
        %v415 = vld [vmem:[#allocation8 + $0xa0] sm:$0xff]
        %v416 = vld [vmem:[#allocation8 + $0xa8] sm:$0xff]
        %v417 = vld [vmem:[#allocation8 + $0xb0] sm:$0xff]
        %v418 = vld [vmem:[#allocation8 + $0xb8] sm:$0xff]
        %v419 = vld [vmem:[#allocation8 + $0xc0] sm:$0xff]
        %v420 = vld [vmem:[#allocation8 + $0xc8] sm:$0xff]
        %v421 = vld [vmem:[#allocation8 + $0xd0] sm:$0xff]
        %v422 = vld [vmem:[#allocation8 + $0xd8] sm:$0xff]
        %v423 = vld [vmem:[#allocation8 + $0xe0] sm:$0xff]
        %v424 = vld [vmem:[#allocation8 + $0xe8] sm:$0xff]
        %v425 = vld [vmem:[#allocation8 + $0xf0] sm:$0xff]
        %v426 = vld [vmem:[#allocation8 + $0xf8] sm:$0xff]
        %v427 = vld [vmem:[%s4] sm:$0x3]
        %v429 = vlaneseq
        %v430 = vshrl.u32 %v429, 7
        %v431 = vsub.s32 0, %v430
        %v432 = vrot.slane %v427, %v431
        %v433 = vlaneseq
        %v434 = vshrl.u32 %v433, 7
        %v435 = vsub.s32 1, %v434
        %v436 = vrot.slane %v427, %v435
        %439 = vmatprep.subr.mxu0 %v426
        %440 = vmatpush1.msra.mxu0 %v425
        %441 = vmatprep.subr.mxu0 %v424
        %442 = vmatpush1.msra.mxu0 %v423
        %443 = vmatprep.subr.mxu0 %v422
        %444 = vmatpush1.msra.mxu0 %v421
        %445 = vmatprep.subr.mxu0 %v420
        %446 = vmatpush1.msra.mxu0 %v419
        %447 = vmatprep.subr.mxu0 %v418
        %448 = vmatpush1.msra.mxu0 %v417
        %449 = vmatprep.subr.mxu0 %v416
        %450 = vmatpush1.msra.mxu0 %v415
        %451 = vmatprep.subr.mxu0 %v414
        %452 = vmatpush1.msra.mxu0 %v413
        %453 = vmatprep.subr.mxu0 %v412
        %454 = vmatpush1.msra.mxu0 %v411
        %455 = vmatprep.subr.mxu0 %v410
        %456 = vmatpush1.msra.mxu0 %v409
        %457 = vmatprep.subr.mxu0 %v408
        %458 = vmatpush1.msra.mxu0 %v407
        %459 = vmatprep.subr.mxu0 %v406
        %460 = vmatpush1.msra.mxu0 %v405
        %461 = vmatprep.subr.mxu0 %v404
        %462 = vmatpush1.msra.mxu0 %v403
        %463 = vmatprep.subr.mxu0 %v402
        %464 = vmatpush1.msra.mxu0 %v401
        %465 = vmatprep.subr.mxu0 %v400
        %466 = vmatpush1.msra.mxu0 %v399
        %467 = vmatprep.subr.mxu0 %v398
        %468 = vmatpush1.msra.mxu0 %v397
        %469 = vmatprep.subr.mxu0 %v396
        %470 = vmatpush1.msra.mxu0 %v395
        %471 = vmatprep.subr.mxu0 0.0
        %472 = vmatpush2.msra.mxu0 0.0
        %473 = vmatprep.subr.mxu0 0.0
        %474 = vmatpush2.msra.mxu0 0.0
        %475 = vmatprep.subr.mxu0 0.0
        %476 = vmatpush2.msra.mxu0 0.0
        %477 = vmatprep.subr.mxu0 0.0
        %478 = vmatpush2.msra.mxu0 0.0
        %479 = vmatprep.subr.mxu0 0.0
        %480 = vmatpush2.msra.mxu0 0.0
        %481 = vmatprep.subr.mxu0 0.0
        %482 = vmatpush2.msra.mxu0 0.0
        %483 = vmatprep.subr.mxu0 0.0
        %484 = vmatpush2.msra.mxu0 0.0
        %485 = vmatprep.subr.mxu0 0.0
        %486 = vmatpush2.msra.mxu0 0.0
        %487 = vmatprep.subr.mxu0 0.0
        %488 = vmatpush2.msra.mxu0 0.0
        %489 = vmatprep.subr.mxu0 0.0
        %490 = vmatpush2.msra.mxu0 0.0
        %491 = vmatprep.subr.mxu0 0.0
        %492 = vmatpush2.msra.mxu0 0.0
        %493 = vmatprep.subr.mxu0 0.0
        %494 = vmatpush2.msra.mxu0 0.0
        %495 = vmatprep.subr.mxu0 0.0
        %496 = vmatpush2.msra.mxu0 0.0
        %497 = vmatprep.subr.mxu0 0.0
        %498 = vmatpush2.msra.mxu0 0.0
        %499 = vmatprep.subr.mxu0 0.0
        %500 = vmatpush2.msra.mxu0 0.0
        %501 = vmatprep.subr.mxu0 0.0
        %502 = vmatpush2.msra.mxu0 0.0
        %503 = vmatprep.mubr.f32.mxu0 0.0
        %504 = vmatmul.mubr.f32.gmra.mxu0 %v394
        %v505 = vpop.f32.mrf.mxu0
        %v506 = vadd.f32 %v432, %v505
        %v507 = vpop.f32.mrf.mxu0
        %v508 = vadd.f32 %v436, %v507
        %509 = vdwg.mxu0
        %v510 = vld [vmem:[%s336] sm:$0xff]
        %s511 = scalar_lea.vmem [#allocation8], 256
        %v512 = vld [vmem:[%s511] sm:$0xff]
        %v513 = vld [vmem:[%s511 + $0x8] sm:$0xff]
        %v514 = vld [vmem:[%s511 + $0x10] sm:$0xff]
        %v515 = vld [vmem:[%s511 + $0x18] sm:$0xff]
        %v516 = vld [vmem:[%s511 + $0x20] sm:$0xff]
        %v517 = vld [vmem:[%s511 + $0x28] sm:$0xff]
        %v518 = vld [vmem:[%s511 + $0x30] sm:$0xff]
        %v519 = vld [vmem:[%s511 + $0x38] sm:$0xff]
        %v520 = vld [vmem:[%s511 + $0x40] sm:$0xff]
        %v521 = vld [vmem:[%s511 + $0x48] sm:$0xff]
        %v522 = vld [vmem:[%s511 + $0x50] sm:$0xff]
        %v523 = vld [vmem:[%s511 + $0x58] sm:$0xff]
        %v524 = vld [vmem:[%s511 + $0x60] sm:$0xff]
        %v525 = vld [vmem:[%s511 + $0x68] sm:$0xff]
        %v526 = vld [vmem:[%s511 + $0x70] sm:$0xff]
        %v527 = vld [vmem:[%s511 + $0x78] sm:$0xff]
        %v528 = vld [vmem:[%s511 + $0x80] sm:$0xff]
        %v529 = vld [vmem:[%s511 + $0x88] sm:$0xff]
        %v530 = vld [vmem:[%s511 + $0x90] sm:$0xff]
        %v531 = vld [vmem:[%s511 + $0x98] sm:$0xff]
        %v532 = vld [vmem:[%s511 + $0xa0] sm:$0xff]
        %v533 = vld [vmem:[%s511 + $0xa8] sm:$0xff]
        %v534 = vld [vmem:[%s511 + $0xb0] sm:$0xff]
        %v535 = vld [vmem:[%s511 + $0xb8] sm:$0xff]
        %v536 = vld [vmem:[%s511 + $0xc0] sm:$0xff]
        %v537 = vld [vmem:[%s511 + $0xc8] sm:$0xff]
        %v538 = vld [vmem:[%s511 + $0xd0] sm:$0xff]
        %v539 = vld [vmem:[%s511 + $0xd8] sm:$0xff]
        %v540 = vld [vmem:[%s511 + $0xe0] sm:$0xff]
        %v541 = vld [vmem:[%s511 + $0xe8] sm:$0xff]
        %v542 = vld [vmem:[%s511 + $0xf0] sm:$0xff]
        %v543 = vld [vmem:[%s511 + $0xf8] sm:$0xff]
        %s544 = scalar_lea.vmem %s4, 2
        %v545 = vld [vmem:[%s544] sm:$0x3]
        %v547 = vlaneseq
        %v548 = vshrl.u32 %v547, 7
        %v549 = vsub.s32 0, %v548
        %v550 = vrot.slane %v545, %v549
        %v551 = vlaneseq
        %v552 = vshrl.u32 %v551, 7
        %v553 = vsub.s32 1, %v552
        %v554 = vrot.slane %v545, %v553
        %557 = vmatprep.subr.mxu0 %v543
        %558 = vmatpush1.msra.mxu0 %v542
        %559 = vmatprep.subr.mxu0 %v541
        %560 = vmatpush1.msra.mxu0 %v540
        %561 = vmatprep.subr.mxu0 %v539
        %562 = vmatpush1.msra.mxu0 %v538
        %563 = vmatprep.subr.mxu0 %v537
        %564 = vmatpush1.msra.mxu0 %v536
        %565 = vmatprep.subr.mxu0 %v535
        %566 = vmatpush1.msra.mxu0 %v534
        %567 = vmatprep.subr.mxu0 %v533
        %568 = vmatpush1.msra.mxu0 %v532
        %569 = vmatprep.subr.mxu0 %v531
        %570 = vmatpush1.msra.mxu0 %v530
        %571 = vmatprep.subr.mxu0 %v529
        %572 = vmatpush1.msra.mxu0 %v528
        %573 = vmatprep.subr.mxu0 %v527
        %574 = vmatpush1.msra.mxu0 %v526
        %575 = vmatprep.subr.mxu0 %v525
        %576 = vmatpush1.msra.mxu0 %v524
        %577 = vmatprep.subr.mxu0 %v523
        %578 = vmatpush1.msra.mxu0 %v522
        %579 = vmatprep.subr.mxu0 %v521
        %580 = vmatpush1.msra.mxu0 %v520
        %581 = vmatprep.subr.mxu0 %v519
        %582 = vmatpush1.msra.mxu0 %v518
        %583 = vmatprep.subr.mxu0 %v517
        %584 = vmatpush1.msra.mxu0 %v516
        %585 = vmatprep.subr.mxu0 %v515
        %586 = vmatpush1.msra.mxu0 %v514
        %587 = vmatprep.subr.mxu0 %v513
        %588 = vmatpush1.msra.mxu0 %v512
        %589 = vmatprep.subr.mxu0 0.0
        %590 = vmatpush2.msra.mxu0 0.0
        %591 = vmatprep.subr.mxu0 0.0
        %592 = vmatpush2.msra.mxu0 0.0
        %593 = vmatprep.subr.mxu0 0.0
        %594 = vmatpush2.msra.mxu0 0.0
        %595 = vmatprep.subr.mxu0 0.0
        %596 = vmatpush2.msra.mxu0 0.0
        %597 = vmatprep.subr.mxu0 0.0
        %598 = vmatpush2.msra.mxu0 0.0
        %599 = vmatprep.subr.mxu0 0.0
        %600 = vmatpush2.msra.mxu0 0.0
        %601 = vmatprep.subr.mxu0 0.0
        %602 = vmatpush2.msra.mxu0 0.0
        %603 = vmatprep.subr.mxu0 0.0
        %604 = vmatpush2.msra.mxu0 0.0
        %605 = vmatprep.subr.mxu0 0.0
        %606 = vmatpush2.msra.mxu0 0.0
        %607 = vmatprep.subr.mxu0 0.0
        %608 = vmatpush2.msra.mxu0 0.0
        %609 = vmatprep.subr.mxu0 0.0
        %610 = vmatpush2.msra.mxu0 0.0
        %611 = vmatprep.subr.mxu0 0.0
        %612 = vmatpush2.msra.mxu0 0.0
        %613 = vmatprep.subr.mxu0 0.0
        %614 = vmatpush2.msra.mxu0 0.0
        %615 = vmatprep.subr.mxu0 0.0
        %616 = vmatpush2.msra.mxu0 0.0
        %617 = vmatprep.subr.mxu0 0.0
        %618 = vmatpush2.msra.mxu0 0.0
        %619 = vmatprep.subr.mxu0 0.0
        %620 = vmatpush2.msra.mxu0 0.0
        %621 = vmatprep.mubr.f32.mxu0 0.0
        %622 = vmatmul.mubr.f32.gmra.mxu0 %v510
        %v623 = vpop.f32.mrf.mxu0
        %v624 = vadd.f32 %v550, %v623
        %v625 = vpop.f32.mrf.mxu0
        %v626 = vadd.f32 %v554, %v625
        %627 = vdwg.mxu0
        %v628 = vld [vmem:[%s345] sm:$0xff]
        %s629 = scalar_lea.vmem [#allocation8], 512
        %v630 = vld [vmem:[%s629] sm:$0xff]
        %v631 = vld [vmem:[%s629 + $0x8] sm:$0xff]
        %v632 = vld [vmem:[%s629 + $0x10] sm:$0xff]
        %v633 = vld [vmem:[%s629 + $0x18] sm:$0xff]
        %v634 = vld [vmem:[%s629 + $0x20] sm:$0xff]
        %v635 = vld [vmem:[%s629 + $0x28] sm:$0xff]
        %v636 = vld [vmem:[%s629 + $0x30] sm:$0xff]
        %v637 = vld [vmem:[%s629 + $0x38] sm:$0xff]
        %v638 = vld [vmem:[%s629 + $0x40] sm:$0xff]
        %v639 = vld [vmem:[%s629 + $0x48] sm:$0xff]
        %v640 = vld [vmem:[%s629 + $0x50] sm:$0xff]
        %v641 = vld [vmem:[%s629 + $0x58] sm:$0xff]
        %v642 = vld [vmem:[%s629 + $0x60] sm:$0xff]
        %v643 = vld [vmem:[%s629 + $0x68] sm:$0xff]
        %v644 = vld [vmem:[%s629 + $0x70] sm:$0xff]
        %v645 = vld [vmem:[%s629 + $0x78] sm:$0xff]
        %v646 = vld [vmem:[%s629 + $0x80] sm:$0xff]
        %v647 = vld [vmem:[%s629 + $0x88] sm:$0xff]
        %v648 = vld [vmem:[%s629 + $0x90] sm:$0xff]
        %v649 = vld [vmem:[%s629 + $0x98] sm:$0xff]
        %v650 = vld [vmem:[%s629 + $0xa0] sm:$0xff]
        %v651 = vld [vmem:[%s629 + $0xa8] sm:$0xff]
        %v652 = vld [vmem:[%s629 + $0xb0] sm:$0xff]
        %v653 = vld [vmem:[%s629 + $0xb8] sm:$0xff]
        %v654 = vld [vmem:[%s629 + $0xc0] sm:$0xff]
        %v655 = vld [vmem:[%s629 + $0xc8] sm:$0xff]
        %v656 = vld [vmem:[%s629 + $0xd0] sm:$0xff]
        %v657 = vld [vmem:[%s629 + $0xd8] sm:$0xff]
        %v658 = vld [vmem:[%s629 + $0xe0] sm:$0xff]
        %v659 = vld [vmem:[%s629 + $0xe8] sm:$0xff]
        %v660 = vld [vmem:[%s629 + $0xf0] sm:$0xff]
        %v661 = vld [vmem:[%s629 + $0xf8] sm:$0xff]
        %s662 = scalar_lea.vmem %s4, 4
        %v663 = vld [vmem:[%s662] sm:$0x3]
        %v665 = vlaneseq
        %v666 = vshrl.u32 %v665, 7
        %v667 = vsub.s32 0, %v666
        %v668 = vrot.slane %v663, %v667
        %v669 = vlaneseq
        %v670 = vshrl.u32 %v669, 7
        %v671 = vsub.s32 1, %v670
        %v672 = vrot.slane %v663, %v671
        %675 = vmatprep.subr.mxu0 %v661
        %676 = vmatpush1.msra.mxu0 %v660
        %677 = vmatprep.subr.mxu0 %v659
        %678 = vmatpush1.msra.mxu0 %v658
        %679 = vmatprep.subr.mxu0 %v657
        %680 = vmatpush1.msra.mxu0 %v656
        %681 = vmatprep.subr.mxu0 %v655
        %682 = vmatpush1.msra.mxu0 %v654
        %683 = vmatprep.subr.mxu0 %v653
        %684 = vmatpush1.msra.mxu0 %v652
        %685 = vmatprep.subr.mxu0 %v651
        %686 = vmatpush1.msra.mxu0 %v650
        %687 = vmatprep.subr.mxu0 %v649
        %688 = vmatpush1.msra.mxu0 %v648
        %689 = vmatprep.subr.mxu0 %v647
        %690 = vmatpush1.msra.mxu0 %v646
        %691 = vmatprep.subr.mxu0 %v645
        %692 = vmatpush1.msra.mxu0 %v644
        %693 = vmatprep.subr.mxu0 %v643
        %694 = vmatpush1.msra.mxu0 %v642
        %695 = vmatprep.subr.mxu0 %v641
        %696 = vmatpush1.msra.mxu0 %v640
        %697 = vmatprep.subr.mxu0 %v639
        %698 = vmatpush1.msra.mxu0 %v638
        %699 = vmatprep.subr.mxu0 %v637
        %700 = vmatpush1.msra.mxu0 %v636
        %701 = vmatprep.subr.mxu0 %v635
        %702 = vmatpush1.msra.mxu0 %v634
        %703 = vmatprep.subr.mxu0 %v633
        %704 = vmatpush1.msra.mxu0 %v632
        %705 = vmatprep.subr.mxu0 %v631
        %706 = vmatpush1.msra.mxu0 %v630
        %707 = vmatprep.subr.mxu0 0.0
        %708 = vmatpush2.msra.mxu0 0.0
        %709 = vmatprep.subr.mxu0 0.0
        %710 = vmatpush2.msra.mxu0 0.0
        %711 = vmatprep.subr.mxu0 0.0
        %712 = vmatpush2.msra.mxu0 0.0
        %713 = vmatprep.subr.mxu0 0.0
        %714 = vmatpush2.msra.mxu0 0.0
        %715 = vmatprep.subr.mxu0 0.0
        %716 = vmatpush2.msra.mxu0 0.0
        %717 = vmatprep.subr.mxu0 0.0
        %718 = vmatpush2.msra.mxu0 0.0
        %719 = vmatprep.subr.mxu0 0.0
        %720 = vmatpush2.msra.mxu0 0.0
        %721 = vmatprep.subr.mxu0 0.0
        %722 = vmatpush2.msra.mxu0 0.0
        %723 = vmatprep.subr.mxu0 0.0
        %724 = vmatpush2.msra.mxu0 0.0
        %725 = vmatprep.subr.mxu0 0.0
        %726 = vmatpush2.msra.mxu0 0.0
        %727 = vmatprep.subr.mxu0 0.0
        %728 = vmatpush2.msra.mxu0 0.0
        %729 = vmatprep.subr.mxu0 0.0
        %730 = vmatpush2.msra.mxu0 0.0
        %731 = vmatprep.subr.mxu0 0.0
        %732 = vmatpush2.msra.mxu0 0.0
        %733 = vmatprep.subr.mxu0 0.0
        %734 = vmatpush2.msra.mxu0 0.0
        %735 = vmatprep.subr.mxu0 0.0
        %736 = vmatpush2.msra.mxu0 0.0
        %737 = vmatprep.subr.mxu0 0.0
        %738 = vmatpush2.msra.mxu0 0.0
        %739 = vmatprep.mubr.f32.mxu0 0.0
        %740 = vmatmul.mubr.f32.gmra.mxu0 %v628
        %v741 = vpop.f32.mrf.mxu0
        %v742 = vadd.f32 %v668, %v741
        %v743 = vpop.f32.mrf.mxu0
        %v744 = vadd.f32 %v672, %v743
        %745 = vdwg.mxu0
        %746 = vmatprep.subr.mxu0 0.0
        %747 = vmatpush1.xpose.msra.mxu0 0.0
        %748 = vmatprep.subr.mxu0 0.0
        %749 = vmatpush1.xpose.msra.mxu0 0.0
        %750 = vmatprep.subr.mxu0 0.0
        %751 = vmatpush1.xpose.msra.mxu0 0.0
        %752 = vmatprep.subr.mxu0 0.0
        %753 = vmatpush1.xpose.msra.mxu0 0.0
        %754 = vmatprep.subr.mxu0 0.0
        %755 = vmatpush1.xpose.msra.mxu0 0.0
        %756 = vmatprep.subr.mxu0 0.0
        %757 = vmatpush1.xpose.msra.mxu0 0.0
        %758 = vmatprep.subr.mxu0 0.0
        %759 = vmatpush1.xpose.msra.mxu0 0.0
        %760 = vmatprep.subr.mxu0 0.0
        %761 = vmatpush1.xpose.msra.mxu0 0.0
        %762 = vmatprep.subr.mxu0 0.0
        %763 = vmatpush1.xpose.msra.mxu0 0.0
        %764 = vmatprep.subr.mxu0 0.0
        %765 = vmatpush1.xpose.msra.mxu0 0.0
        %766 = vmatprep.subr.mxu0 0.0
        %767 = vmatpush1.xpose.msra.mxu0 0.0
        %768 = vmatprep.subr.mxu0 0.0
        %769 = vmatpush1.xpose.msra.mxu0 0.0
        %770 = vmatprep.subr.mxu0 0.0
        %771 = vmatpush1.xpose.msra.mxu0 0.0
        %772 = vmatprep.subr.mxu0 0.0
        %773 = vmatpush1.xpose.msra.mxu0 0.0
        %774 = vmatprep.subr.mxu0 0.0
        %775 = vmatpush1.xpose.msra.mxu0 0.0
        %776 = vmatprep.subr.mxu0 0.0
        %777 = vmatpush1.xpose.msra.mxu0 %v624
        %778 = vmatprep.subr.mxu0 0.0
        %779 = vmatpush2.xpose.msra.mxu0 0.0
        %780 = vmatprep.subr.mxu0 0.0
        %781 = vmatpush2.xpose.msra.mxu0 0.0
        %782 = vmatprep.subr.mxu0 0.0
        %783 = vmatpush2.xpose.msra.mxu0 0.0
        %784 = vmatprep.subr.mxu0 0.0
        %785 = vmatpush2.xpose.msra.mxu0 0.0
        %786 = vmatprep.subr.mxu0 0.0
        %787 = vmatpush2.xpose.msra.mxu0 0.0
        %788 = vmatprep.subr.mxu0 0.0
        %789 = vmatpush2.xpose.msra.mxu0 0.0
        %790 = vmatprep.subr.mxu0 0.0
        %791 = vmatpush2.xpose.msra.mxu0 0.0
        %792 = vmatprep.subr.mxu0 0.0
        %793 = vmatpush2.xpose.msra.mxu0 0.0
        %794 = vmatprep.subr.mxu0 0.0
        %795 = vmatpush2.xpose.msra.mxu0 0.0
        %796 = vmatprep.subr.mxu0 0.0
        %797 = vmatpush2.xpose.msra.mxu0 0.0
        %798 = vmatprep.subr.mxu0 0.0
        %799 = vmatpush2.xpose.msra.mxu0 0.0
        %800 = vmatprep.subr.mxu0 0.0
        %801 = vmatpush2.xpose.msra.mxu0 0.0
        %802 = vmatprep.subr.mxu0 0.0
        %803 = vmatpush2.xpose.msra.mxu0 0.0
        %804 = vmatprep.subr.mxu0 0.0
        %805 = vmatpush2.xpose.msra.mxu0 0.0
        %806 = vmatprep.subr.mxu0 0.0
        %807 = vmatpush2.xpose.msra.mxu0 0.0
        %808 = vmatprep.subr.mxu0 0.0
        %809 = vmatpush2.xpose.msra.mxu0 0.0
        %810 = vmatprep.mubr.f32.mxu0 0.0
        %811 = vmatmul.mubr.f32.gmra.mxu0 %v506
        %v812 = vpop.f32.mrf.mxu0
        %v813 = vadd.f32 0.0, %v812
        %v814 = vpop.f32.mrf.mxu0
        %815 = vdwg.mxu0
        %v816 = vmul.f32 %v813, 0.2
        %vm817 = vcmask 64512
        %v818 = vsel %vm817, %v816, -inf
        %819 = vmax.xlane.f32.xlu0 %v818
        %v820 = vpop.xlane.xlu0 %819
        %v821 = vsub.f32 %v816, %v820
        %v822 = vmul.f32 %v821, 1.442695
        %v823 = vpow.pop %v822
        %v824 = vsel %vm817, %v823, 0.0
        %825 = vadd.xlane.f32.xlu0 %v824
        %v826 = vpop.xlane.xlu0 %825
        %v827 = vrcp.pop %v826
        %v828 = vmul.f32 %v823, %v827
        %v830 = vsel %vm817, %v828, 0
        %832 = vmatprep.subr.mxu0 0.0
        %833 = vmatpush1.msra.mxu0 0.0
        %834 = vmatprep.subr.mxu0 0.0
        %835 = vmatpush1.msra.mxu0 0.0
        %836 = vmatprep.subr.mxu0 0.0
        %837 = vmatpush1.msra.mxu0 0.0
        %838 = vmatprep.subr.mxu0 0.0
        %839 = vmatpush1.msra.mxu0 0.0
        %840 = vmatprep.subr.mxu0 0.0
        %841 = vmatpush1.msra.mxu0 0.0
        %842 = vmatprep.subr.mxu0 0.0
        %843 = vmatpush1.msra.mxu0 0.0
        %844 = vmatprep.subr.mxu0 0.0
        %845 = vmatpush1.msra.mxu0 0.0
        %846 = vmatprep.subr.mxu0 0.0
        %847 = vmatpush1.msra.mxu0 0.0
        %848 = vmatprep.subr.mxu0 0.0
        %849 = vmatpush1.msra.mxu0 0.0
        %850 = vmatprep.subr.mxu0 0.0
        %851 = vmatpush1.msra.mxu0 0.0
        %852 = vmatprep.subr.mxu0 0.0
        %853 = vmatpush1.msra.mxu0 0.0
        %854 = vmatprep.subr.mxu0 0.0
        %855 = vmatpush1.msra.mxu0 0.0
        %856 = vmatprep.subr.mxu0 0.0
        %857 = vmatpush1.msra.mxu0 0.0
        %858 = vmatprep.subr.mxu0 0.0
        %859 = vmatpush1.msra.mxu0 0.0
        %860 = vmatprep.subr.mxu0 0.0
        %861 = vmatpush1.msra.mxu0 0.0
        %862 = vmatprep.subr.mxu0 0.0
        %863 = vmatpush1.msra.mxu0 %v742
        %864 = vmatprep.subr.mxu0 0.0
        %865 = vmatpush2.msra.mxu0 0.0
        %866 = vmatprep.subr.mxu0 0.0
        %867 = vmatpush2.msra.mxu0 0.0
        %868 = vmatprep.subr.mxu0 0.0
        %869 = vmatpush2.msra.mxu0 0.0
        %870 = vmatprep.subr.mxu0 0.0
        %871 = vmatpush2.msra.mxu0 0.0
        %872 = vmatprep.subr.mxu0 0.0
        %873 = vmatpush2.msra.mxu0 0.0
        %874 = vmatprep.subr.mxu0 0.0
        %875 = vmatpush2.msra.mxu0 0.0
        %876 = vmatprep.subr.mxu0 0.0
        %877 = vmatpush2.msra.mxu0 0.0
        %878 = vmatprep.subr.mxu0 0.0
        %879 = vmatpush2.msra.mxu0 0.0
        %880 = vmatprep.subr.mxu0 0.0
        %881 = vmatpush2.msra.mxu0 0.0
        %882 = vmatprep.subr.mxu0 0.0
        %883 = vmatpush2.msra.mxu0 0.0
        %884 = vmatprep.subr.mxu0 0.0
        %885 = vmatpush2.msra.mxu0 0.0
        %886 = vmatprep.subr.mxu0 0.0
        %887 = vmatpush2.msra.mxu0 0.0
        %888 = vmatprep.subr.mxu0 0.0
        %889 = vmatpush2.msra.mxu0 0.0
        %890 = vmatprep.subr.mxu0 0.0
        %891 = vmatpush2.msra.mxu0 0.0
        %892 = vmatprep.subr.mxu0 0.0
        %893 = vmatpush2.msra.mxu0 0.0
        %894 = vmatprep.subr.mxu0 0.0
        %895 = vmatpush2.msra.mxu0 0.0
        %896 = vmatprep.mubr.f32.mxu0 0.0
        %897 = vmatmul.mubr.f32.gmra.mxu0 %v830
        %v898 = vpop.f32.mrf.mxu0
        %v899 = vadd.f32 0.0, %v898
        %v900 = vpop.f32.mrf.mxu0
        %901 = vdwg.mxu0
        %902 = vmatprep.subr.mxu0 0.0
        %903 = vmatpush1.xpose.msra.mxu0 0.0
        %904 = vmatprep.subr.mxu0 0.0
        %905 = vmatpush1.xpose.msra.mxu0 0.0
        %906 = vmatprep.subr.mxu0 0.0
        %907 = vmatpush1.xpose.msra.mxu0 0.0
        %908 = vmatprep.subr.mxu0 0.0
        %909 = vmatpush1.xpose.msra.mxu0 0.0
        %910 = vmatprep.subr.mxu0 0.0
        %911 = vmatpush1.xpose.msra.mxu0 0.0
        %912 = vmatprep.subr.mxu0 0.0
        %913 = vmatpush1.xpose.msra.mxu0 0.0
        %914 = vmatprep.subr.mxu0 0.0
        %915 = vmatpush1.xpose.msra.mxu0 0.0
        %916 = vmatprep.subr.mxu0 0.0
        %917 = vmatpush1.xpose.msra.mxu0 0.0
        %918 = vmatprep.subr.mxu0 0.0
        %919 = vmatpush1.xpose.msra.mxu0 0.0
        %920 = vmatprep.subr.mxu0 0.0
        %921 = vmatpush1.xpose.msra.mxu0 0.0
        %922 = vmatprep.subr.mxu0 0.0
        %923 = vmatpush1.xpose.msra.mxu0 0.0
        %924 = vmatprep.subr.mxu0 0.0
        %925 = vmatpush1.xpose.msra.mxu0 0.0
        %926 = vmatprep.subr.mxu0 0.0
        %927 = vmatpush1.xpose.msra.mxu0 0.0
        %928 = vmatprep.subr.mxu0 0.0
        %929 = vmatpush1.xpose.msra.mxu0 0.0
        %930 = vmatprep.subr.mxu0 0.0
        %931 = vmatpush1.xpose.msra.mxu0 0.0
        %932 = vmatprep.subr.mxu0 0.0
        %933 = vmatpush1.xpose.msra.mxu0 %v626
        %934 = vmatprep.subr.mxu0 0.0
        %935 = vmatpush2.xpose.msra.mxu0 0.0
        %936 = vmatprep.subr.mxu0 0.0
        %937 = vmatpush2.xpose.msra.mxu0 0.0
        %938 = vmatprep.subr.mxu0 0.0
        %939 = vmatpush2.xpose.msra.mxu0 0.0
        %940 = vmatprep.subr.mxu0 0.0
        %941 = vmatpush2.xpose.msra.mxu0 0.0
        %942 = vmatprep.subr.mxu0 0.0
        %943 = vmatpush2.xpose.msra.mxu0 0.0
        %944 = vmatprep.subr.mxu0 0.0
        %945 = vmatpush2.xpose.msra.mxu0 0.0
        %946 = vmatprep.subr.mxu0 0.0
        %947 = vmatpush2.xpose.msra.mxu0 0.0
        %948 = vmatprep.subr.mxu0 0.0
        %949 = vmatpush2.xpose.msra.mxu0 0.0
        %950 = vmatprep.subr.mxu0 0.0
        %951 = vmatpush2.xpose.msra.mxu0 0.0
        %952 = vmatprep.subr.mxu0 0.0
        %953 = vmatpush2.xpose.msra.mxu0 0.0
        %954 = vmatprep.subr.mxu0 0.0
        %955 = vmatpush2.xpose.msra.mxu0 0.0
        %956 = vmatprep.subr.mxu0 0.0
        %957 = vmatpush2.xpose.msra.mxu0 0.0
        %958 = vmatprep.subr.mxu0 0.0
        %959 = vmatpush2.xpose.msra.mxu0 0.0
        %960 = vmatprep.subr.mxu0 0.0
        %961 = vmatpush2.xpose.msra.mxu0 0.0
        %962 = vmatprep.subr.mxu0 0.0
        %963 = vmatpush2.xpose.msra.mxu0 0.0
        %964 = vmatprep.subr.mxu0 0.0
        %965 = vmatpush2.xpose.msra.mxu0 0.0
        %966 = vmatprep.mubr.f32.mxu0 0.0
        %967 = vmatmul.mubr.f32.gmra.mxu0 %v508
        %v968 = vpop.f32.mrf.mxu0
        %v969 = vadd.f32 0.0, %v968
        %v970 = vpop.f32.mrf.mxu0
        %971 = vdwg.mxu0
        %v972 = vmul.f32 %v969, 0.2
        %v973 = vsel %vm817, %v972, -inf
        %974 = vmax.xlane.f32.xlu0 %v973
        %v975 = vpop.xlane.xlu0 %974
        %v976 = vsub.f32 %v972, %v975
        %v977 = vmul.f32 %v976, 1.442695
        %v978 = vpow.pop %v977
        %v979 = vsel %vm817, %v978, 0.0
        %980 = vadd.xlane.f32.xlu0 %v979
        %v981 = vpop.xlane.xlu0 %980
        %v982 = vrcp.pop %v981
        %v983 = vmul.f32 %v978, %v982
        %v985 = vsel %vm817, %v983, 0
        %987 = vmatprep.subr.mxu0 0.0
        %988 = vmatpush1.msra.mxu0 0.0
        %989 = vmatprep.subr.mxu0 0.0
        %990 = vmatpush1.msra.mxu0 0.0
        %991 = vmatprep.subr.mxu0 0.0
        %992 = vmatpush1.msra.mxu0 0.0
        %993 = vmatprep.subr.mxu0 0.0
        %994 = vmatpush1.msra.mxu0 0.0
        %995 = vmatprep.subr.mxu0 0.0
        %996 = vmatpush1.msra.mxu0 0.0
        %997 = vmatprep.subr.mxu0 0.0
        %998 = vmatpush1.msra.mxu0 0.0
        %999 = vmatprep.subr.mxu0 0.0
        %1000 = vmatpush1.msra.mxu0 0.0
        %1001 = vmatprep.subr.mxu0 0.0
        %1002 = vmatpush1.msra.mxu0 0.0
        %1003 = vmatprep.subr.mxu0 0.0
        %1004 = vmatpush1.msra.mxu0 0.0
        %1005 = vmatprep.subr.mxu0 0.0
        %1006 = vmatpush1.msra.mxu0 0.0
        %1007 = vmatprep.subr.mxu0 0.0
        %1008 = vmatpush1.msra.mxu0 0.0
        %1009 = vmatprep.subr.mxu0 0.0
        %1010 = vmatpush1.msra.mxu0 0.0
        %1011 = vmatprep.subr.mxu0 0.0
        %1012 = vmatpush1.msra.mxu0 0.0
        %1013 = vmatprep.subr.mxu0 0.0
        %1014 = vmatpush1.msra.mxu0 0.0
        %1015 = vmatprep.subr.mxu0 0.0
        %1016 = vmatpush1.msra.mxu0 0.0
        %1017 = vmatprep.subr.mxu0 0.0
        %1018 = vmatpush1.msra.mxu0 %v744
        %1019 = vmatprep.subr.mxu0 0.0
        %1020 = vmatpush2.msra.mxu0 0.0
        %1021 = vmatprep.subr.mxu0 0.0
        %1022 = vmatpush2.msra.mxu0 0.0
        %1023 = vmatprep.subr.mxu0 0.0
        %1024 = vmatpush2.msra.mxu0 0.0
        %1025 = vmatprep.subr.mxu0 0.0
        %1026 = vmatpush2.msra.mxu0 0.0
        %1027 = vmatprep.subr.mxu0 0.0
        %1028 = vmatpush2.msra.mxu0 0.0
        %1029 = vmatprep.subr.mxu0 0.0
        %1030 = vmatpush2.msra.mxu0 0.0
        %1031 = vmatprep.subr.mxu0 0.0
        %1032 = vmatpush2.msra.mxu0 0.0
        %1033 = vmatprep.subr.mxu0 0.0
        %1034 = vmatpush2.msra.mxu0 0.0
        %1035 = vmatprep.subr.mxu0 0.0
        %1036 = vmatpush2.msra.mxu0 0.0
        %1037 = vmatprep.subr.mxu0 0.0
        %1038 = vmatpush2.msra.mxu0 0.0
        %1039 = vmatprep.subr.mxu0 0.0
        %1040 = vmatpush2.msra.mxu0 0.0
        %1041 = vmatprep.subr.mxu0 0.0
        %1042 = vmatpush2.msra.mxu0 0.0
        %1043 = vmatprep.subr.mxu0 0.0
        %1044 = vmatpush2.msra.mxu0 0.0
        %1045 = vmatprep.subr.mxu0 0.0
        %1046 = vmatpush2.msra.mxu0 0.0
        %1047 = vmatprep.subr.mxu0 0.0
        %1048 = vmatpush2.msra.mxu0 0.0
        %1049 = vmatprep.subr.mxu0 0.0
        %1050 = vmatpush2.msra.mxu0 0.0
        %1051 = vmatprep.mubr.f32.mxu0 0.0
        %1052 = vmatmul.mubr.f32.gmra.mxu0 %v985
        %v1053 = vpop.f32.mrf.mxu0
        %v1054 = vadd.f32 0.0, %v1053
        %v1055 = vpop.f32.mrf.mxu0
        %1056 = vdwg.mxu0
        %v1057 = vld [vmem:[#allocation10] sm:$0xff]
        %v1058 = vld [vmem:[#allocation10 + $0x8] sm:$0xff]
        %v1059 = vld [vmem:[#allocation10 + $0x10] sm:$0xff]
        %v1060 = vld [vmem:[#allocation10 + $0x18] sm:$0xff]
        %v1061 = vld [vmem:[#allocation10 + $0x20] sm:$0xff]
        %v1062 = vld [vmem:[#allocation10 + $0x28] sm:$0xff]
        %v1063 = vld [vmem:[#allocation10 + $0x30] sm:$0xff]
        %v1064 = vld [vmem:[#allocation10 + $0x38] sm:$0xff]
        %v1065 = vld [vmem:[#allocation10 + $0x40] sm:$0xff]
        %v1066 = vld [vmem:[#allocation10 + $0x48] sm:$0xff]
        %v1067 = vld [vmem:[#allocation10 + $0x50] sm:$0xff]
        %v1068 = vld [vmem:[#allocation10 + $0x58] sm:$0xff]
        %v1069 = vld [vmem:[#allocation10 + $0x60] sm:$0xff]
        %v1070 = vld [vmem:[#allocation10 + $0x68] sm:$0xff]
        %v1071 = vld [vmem:[#allocation10 + $0x70] sm:$0xff]
        %v1072 = vld [vmem:[#allocation10 + $0x78] sm:$0xff]
        %v1073 = vld [vmem:[#allocation10 + $0x80] sm:$0xff]
        %v1074 = vld [vmem:[#allocation10 + $0x88] sm:$0xff]
        %v1075 = vld [vmem:[#allocation10 + $0x90] sm:$0xff]
        %v1076 = vld [vmem:[#allocation10 + $0x98] sm:$0xff]
        %v1077 = vld [vmem:[#allocation10 + $0xa0] sm:$0xff]
        %v1078 = vld [vmem:[#allocation10 + $0xa8] sm:$0xff]
        %v1079 = vld [vmem:[#allocation10 + $0xb0] sm:$0xff]
        %v1080 = vld [vmem:[#allocation10 + $0xb8] sm:$0xff]
        %v1081 = vld [vmem:[#allocation10 + $0xc0] sm:$0xff]
        %v1082 = vld [vmem:[#allocation10 + $0xc8] sm:$0xff]
        %v1083 = vld [vmem:[#allocation10 + $0xd0] sm:$0xff]
        %v1084 = vld [vmem:[#allocation10 + $0xd8] sm:$0xff]
        %v1085 = vld [vmem:[#allocation10 + $0xe0] sm:$0xff]
        %v1086 = vld [vmem:[#allocation10 + $0xe8] sm:$0xff]
        %v1087 = vld [vmem:[#allocation10 + $0xf0] sm:$0xff]
        %v1088 = vld [vmem:[#allocation10 + $0xf8] sm:$0xff]
        %v1089 = vld [vmem:[%s6] sm:$0x1]
        %v1091 = vlaneseq
        %v1092 = vshrl.u32 %v1091, 7
        %v1093 = vsub.s32 0, %v1092
        %v1094 = vrot.slane %v1089, %v1093
        %1096 = vmatprep.subr.mxu0 0.0
        %1097 = vmatpush1.msra.mxu0 %v1072
        %1098 = vmatprep.subr.mxu0 0.0
        %1099 = vmatpush1.msra.mxu0 %v1071
        %1100 = vmatprep.subr.mxu0 0.0
        %1101 = vmatpush1.msra.mxu0 %v1070
        %1102 = vmatprep.subr.mxu0 0.0
        %1103 = vmatpush1.msra.mxu0 %v1069
        %1104 = vmatprep.subr.mxu0 0.0
        %1105 = vmatpush1.msra.mxu0 %v1068
        %1106 = vmatprep.subr.mxu0 0.0
        %1107 = vmatpush1.msra.mxu0 %v1067
        %1108 = vmatprep.subr.mxu0 0.0
        %1109 = vmatpush1.msra.mxu0 %v1066
        %1110 = vmatprep.subr.mxu0 0.0
        %1111 = vmatpush1.msra.mxu0 %v1065
        %1112 = vmatprep.subr.mxu0 0.0
        %1113 = vmatpush1.msra.mxu0 %v1064
        %1114 = vmatprep.subr.mxu0 0.0
        %1115 = vmatpush1.msra.mxu0 %v1063
        %1116 = vmatprep.subr.mxu0 0.0
        %1117 = vmatpush1.msra.mxu0 %v1062
        %1118 = vmatprep.subr.mxu0 0.0
        %1119 = vmatpush1.msra.mxu0 %v1061
        %1120 = vmatprep.subr.mxu0 0.0
        %1121 = vmatpush1.msra.mxu0 %v1060
        %1122 = vmatprep.subr.mxu0 0.0
        %1123 = vmatpush1.msra.mxu0 %v1059
        %1124 = vmatprep.subr.mxu0 0.0
        %1125 = vmatpush1.msra.mxu0 %v1058
        %1126 = vmatprep.subr.mxu0 0.0
        %1127 = vmatpush1.msra.mxu0 %v1057
        %1128 = vmatprep.subr.mxu0 0.0
        %1129 = vmatpush2.msra.mxu0 %v1088
        %1130 = vmatprep.subr.mxu0 0.0
        %1131 = vmatpush2.msra.mxu0 %v1087
        %1132 = vmatprep.subr.mxu0 0.0
        %1133 = vmatpush2.msra.mxu0 %v1086
        %1134 = vmatprep.subr.mxu0 0.0
        %1135 = vmatpush2.msra.mxu0 %v1085
        %1136 = vmatprep.subr.mxu0 0.0
        %1137 = vmatpush2.msra.mxu0 %v1084
        %1138 = vmatprep.subr.mxu0 0.0
        %1139 = vmatpush2.msra.mxu0 %v1083
        %1140 = vmatprep.subr.mxu0 0.0
        %1141 = vmatpush2.msra.mxu0 %v1082
        %1142 = vmatprep.subr.mxu0 0.0
        %1143 = vmatpush2.msra.mxu0 %v1081
        %1144 = vmatprep.subr.mxu0 0.0
        %1145 = vmatpush2.msra.mxu0 %v1080
        %1146 = vmatprep.subr.mxu0 0.0
        %1147 = vmatpush2.msra.mxu0 %v1079
        %1148 = vmatprep.subr.mxu0 0.0
        %1149 = vmatpush2.msra.mxu0 %v1078
        %1150 = vmatprep.subr.mxu0 0.0
        %1151 = vmatpush2.msra.mxu0 %v1077
        %1152 = vmatprep.subr.mxu0 0.0
        %1153 = vmatpush2.msra.mxu0 %v1076
        %1154 = vmatprep.subr.mxu0 0.0
        %1155 = vmatpush2.msra.mxu0 %v1075
        %1156 = vmatprep.subr.mxu0 0.0
        %1157 = vmatpush2.msra.mxu0 %v1074
        %1158 = vmatprep.subr.mxu0 0.0
        %1159 = vmatpush2.msra.mxu0 %v1073
        %1160 = vmatprep.mubr.f32.mxu0 %v1054
        %1161 = vmatmul.mubr.f32.gmra.mxu0 %v899
        %v1162 = vpop.f32.mrf.mxu0
        %v1163 = vadd.f32 %v1094, %v1162
        %v1164 = vpop.f32.mrf.mxu0
        %1165 = vdwg.mxu0
        %1166 = vst [vmem:[%s393] sm:$0xff] %v1163
        %s1167 = sand.u32 %s198, 1
        %s1168 = scalar_lea.sflag [#allocation4], %s1167
        %s1169 = sand.u32 %s198, 1
        %s1170 = smul.addr %s1169, 8
        %s1171 = scalar_lea.vmem [#allocation11], %s1170
        // Predicated region
        $region69: #{tpu_custom_call.1} parent=47 // pred_check
          %p1172 = pneg %p208
        $region70: #{tpu_custom_call.1} parent=47 // pred_check_branch
          %1174 = sbr.rel (%p1172) target = $region72
        $region71: #{tpu_custom_call.1} parent=47 // pred_region
          %s1176 = ssub.s32 128, 128
          %1177 = vsyncadd %s1168, %s1176
          %s1178 = smul.addr %s28, 128
          %s1179 = scalar_lea.hbm %s7, %s1178
          %s1181 = sshll.u32 %s1171, 4
          %s1182 = int_to_ptr.vmem [resolvable:$true] %s1181
          %1184 = dma.vmem_to_hbm [thread:$0]  %s1182, 128, %s1179, %s1168
        $region72: #{tpu_custom_call.1} parent=47 // pred_fallthru
          _
      $region48: #{tpu_custom_call.1} parent=5 // pred_fallthru
        _
      %p1185 = scmp.le.s32.totalorder 2, %s23
      // Predicated region
      $region73: #{tpu_custom_call.1} parent=5 // pred_check
        %p1186 = pneg %p1185
      $region74: #{tpu_custom_call.1} parent=5 // pred_check_branch
        %1188 = sbr.rel (%p1186) target = $region76
      $region75: #{tpu_custom_call.1} parent=5 // pred_region
        %s1189 = ssub.s32 %s23, 2
        // Predicated region
        $region77: #{tpu_custom_call.1} parent=75 // pred_check
          %p1190 = pneg %p214
        $region78: #{tpu_custom_call.1} parent=75 // pred_check_branch
          %1192 = sbr.rel (%p1190) target = $region80
        $region79: #{tpu_custom_call.1} parent=75 // pred_region
          %s1193 = sand.u32 %s199, 1
          %s1194 = scalar_lea.sflag [#allocation4], %s1193
          %s1195 = sand.u32 %s199, 1
          %s1196 = smul.addr %s1195, 8
          %s1197 = scalar_lea.vmem [#allocation11], %s1196
          %1198 = dma.done %s1194, 128
        $region80: #{tpu_custom_call.1} parent=75 // pred_fallthru
          _
      $region76: #{tpu_custom_call.1} parent=5 // pred_fallthru
        _
    $region6: #{tpu_custom_call.1} parent=1 // loop_footer
      %s27 = sadd.s32 1, %s23
    $region7: #{tpu_custom_call.1} parent=1 // loop_footer_branch
      %22 = sbr.rel target = $region3
    $region8: #{tpu_custom_call.1} parent=1 // loop_exit
      _
    %1199 = vsyncpa [#allocation3], 1
    %s1200 = scalar_lea.sflag [#allocation3], 1
    %1201 = vsyncpa %s1200, 1
    %1202 = vsyncpa [#allocation6], 1
    %s1203 = scalar_lea.sflag [#allocation6], 1
    %1204 = vsyncpa %s1203, 1
    %1205 = vsyncpa [#allocation9], 1
    %1206 = vsyncpa [#allocation4], 1
    %s1207 = scalar_lea.sflag [#allocation4], 1
    %1208 = vsyncpa %s1207, 1

</llo_original>
